<compile_context>
chip_gen: v7x
topology: tpu7x:2x2x1
jax: 0.10.0
libtpu: 0.0.40
codegen_flags: <defaults>
</compile_context>

<pallas_src>
import functools

import numpy as np
import jax
import jax.numpy as jnp
from jax.experimental import pallas as pl
from jax.experimental.pallas import tpu as pltpu


def _make_gat_kernel(*, B, L, Ks, num_layers, negative_slope):
    """Builds a fused kernel for `num_layers` stacked GAT layers.

    Kernel ref layout:
      refs[0]            : X    [B*L, F_in0]
      refs[1]            : adj  [L, L]
      refs[2 + 4*i ...]  : per layer i:
                             W_all [F_in, K*F_out]  (head-contiguous columns)
                             b_all [1, K*F_out]
                             A     [K*F_out, 2K]    (a_src block | a_dst block)
                             t     [1, 2K]          (attention bias | zeros)
      refs[-1]           : out  [B*L, F_out_last]
    """
    slope_const = float(negative_slope)

    def kernel(*refs):
        x_ref, adj_ref = refs[0], refs[1]
        out_ref = refs[-1]

        adj = adj_ref[...]
        mask = adj > 0.0                     # [L, L] hoisted once, reused everywhere
        mask_f = mask.astype(jnp.float32)
        neg_big = jnp.float32(-1e30)
        slope = jnp.float32(slope_const)

        def gat_layer(X, W, bias, A, t, K, sum_heads):
            # X: [B*L, F_in]  W: [F_in, K*Fo]  bias: [1, K*Fo]  A: [K*Fo, 2K]  t: [1, 2K]
            Fo = W.shape[1] // K
            # All heads at once; batch folded into sublanes -> one MXU matmul.
            H = jnp.dot(X, W, preferred_element_type=jnp.float32) + bias   # [B*L, K*Fo]
            # Attention scores for all heads as one matmul.  Columns 0..K-1 are
            # the "target/src" part (attention bias folded in via t), columns
            # K..2K-1 the "neighbor/dst" part.
            E = jnp.dot(H, A, preferred_element_type=jnp.float32) + t      # [B*L, 2K]
            E_src = E[:, :K]                                               # [B*L, K]
            E_dst_T = jnp.transpose(E[:, K:])                              # [K, B*L]

            batch_blocks = []
            for b in range(B):
                head_outs = []
                for k in range(K):
                    e_src = E_src[b * L:(b + 1) * L, k:k + 1]      # [L, 1]
                    e_dst = E_dst_T[k:k + 1, b * L:(b + 1) * L]    # [1, L]
                    logits = e_src + e_dst                          # [L, L]
                    # leaky_relu, then softmax restricted to neighbors.
                    logits = jnp.where(logits >= 0.0, logits, slope * logits)
                    logits = jnp.where(mask, logits, neg_big)
                    m = jnp.max(logits, axis=-1, keepdims=True)
                    p = jnp.exp(logits - m) * mask_f
                    denom = jnp.sum(p, axis=-1, keepdims=True)
                    # Zero-neighbor rows give all-zero alpha (matches the
                    # reference's empty-neighbor sum == 0) instead of NaN.
                    alpha = p / jnp.maximum(denom, jnp.float32(1e-30))
                    out_bk = jnp.dot(alpha, H[b * L:(b + 1) * L, k * Fo:(k + 1) * Fo],
                                     preferred_element_type=jnp.float32)   # [L, Fo]
                    head_outs.append(out_bk)
                if sum_heads:
                    acc = head_outs[0]
                    for h_k in head_outs[1:]:
                        acc = acc + h_k
                    batch_blocks.append(acc)                                # [L, Fo]
                else:
                    batch_blocks.append(jnp.concatenate(head_outs, axis=-1))  # [L, K*Fo]
            return jnp.concatenate(batch_blocks, axis=0)                     # [B*L, ...]

        h = x_ref[...]
        ridx = 2
        for li in range(num_layers):
            W = refs[ridx][...]
            bias = refs[ridx + 1][...]
            A = refs[ridx + 2][...]
            t = refs[ridx + 3][...]
            ridx += 4
            h = gat_layer(h, W, bias, A, t, Ks[li],
                          sum_heads=(li == num_layers - 1))
        out_ref[...] = h

    return kernel


def pack_gat_params(layer_params):
    """Packs per-head torch-layout params into the fused-kernel layout.

    layer_params: list of (W [K,F_in,F_out], b [K,1,F_out], a_src [K,1,F_out],
                           a_dst [K,1,F_out], b_att [K]) in torch feature order.
    """
    packed = []
    prev_K = prev_F = None
    for li, (W, b, a_s, a_d, b_a) in enumerate(layer_params):
        K, F_in, F_out = W.shape
        if li > 0:
            # Undo torch's f*K_prev + k_prev hidden interleave: the kernel's
            # hidden activations are head-contiguous (k_prev*F_prev + f).
            perm = np.asarray([(c % prev_F) * prev_K + (c // prev_F)
                               for c in range(prev_K * prev_F)], dtype=np.int32)
            W = W[:, perm, :]
        W_all = jnp.transpose(W, (1, 0, 2)).reshape(F_in, K * F_out)
        b_all = jnp.reshape(b, (1, K * F_out))
        A = jnp.zeros((K * F_out, 2 * K), jnp.float32)
        for k in range(K):
            A = A.at[k * F_out:(k + 1) * F_out, k].set(a_s[k, 0])
            A = A.at[k * F_out:(k + 1) * F_out, K + k].set(a_d[k, 0])
        t_row = jnp.concatenate(
            [jnp.reshape(b_a, (1, K)), jnp.zeros((1, K), jnp.float32)], axis=1)
        packed.append((W_all, b_all, A, t_row))
        prev_K, prev_F = K, F_out
    return packed


def gat_model_forward(x, packed_params, adj, *, negative_slope, horizon, n_target_feat):
    """GATModel.forward.  x: [B, num_input_features, num_links]."""
    B = x.shape[0]
    L = adj.shape[0]
    # torch: x.view(B, F_in, L).transpose(1, 2) -> node-major; fold batch into sublanes.
    h0 = jnp.transpose(x.reshape(B, -1, L), (0, 2, 1)).astype(jnp.float32)
    X2 = h0.reshape(B * L, h0.shape[-1])

    num_layers = len(packed_params)
    Ks = tuple(int(p[3].shape[1]) // 2 for p in packed_params)       # t is [1, 2K]
    out_size = int(packed_params[-1][0].shape[1]) // Ks[-1]

    flat = [X2, adj.astype(jnp.float32)]
    for p in packed_params:
        flat.extend(p)

    kernel = _make_gat_kernel(B=B, L=L, Ks=Ks, num_layers=num_layers,
                              negative_slope=negative_slope)
    # TODO(synk): for large graphs (L >~ 1k) add a query-row grid with
    # "parallel" dimension_semantics and a streaming softmax instead of the
    # dense [L, L] attention held in VMEM.
    out = pl.pallas_call(
        kernel,
        out_shape=jax.ShapeDtypeStruct((B * L, out_size), jnp.float32),
        in_specs=[pl.BlockSpec(memory_space=pltpu.MemorySpace.VMEM)] * len(flat),
        out_specs=pl.BlockSpec(memory_space=pltpu.MemorySpace.VMEM),
    )(*flat)

    # torch: view(B, L, n_tf, horizon).permute(0, 3, 1, 2).view(B, horizon, -1)
    out = out.reshape(B, L, n_target_feat, horizon)
    out = jnp.transpose(out, (0, 3, 1, 2)).reshape(B, horizon, L * n_target_feat)
    return out


def gat_reference(x, layer_params, adj, *, negative_slope, horizon, n_target_feat):
    """Pure-jnp reference mirroring the PyTorch module semantics."""
    B = x.shape[0]
    L = adj.shape[0]
    h = jnp.transpose(x.reshape(B, -1, L), (0, 2, 1)).astype(jnp.float32)
    num_layers = len(layer_params)
    for li, (W, b, a_s, a_d, b_a) in enumerate(layer_params):
        K, F_in, F_out = W.shape
        heads = []
        for k in range(K):
            Hk = jnp.einsum('blf,fg->blg', h, W[k]) + b[k][None]     # [B, L, F_out]
            e_src = jnp.einsum('blg,g->bl', Hk, a_s[k, 0])
            e_dst = jnp.einsum('blg,g->bl', Hk, a_d[k, 0])
            logits = e_src[:, :, None] + e_dst[:, None, :] + b_a[k]
            logits = jnp.where(logits >= 0, logits, negative_slope * logits)
            logits = jnp.where(adj[None, :, :] > 0, logits, -1e30)
            alpha = jax.nn.softmax(logits, axis=-1)
            heads.append(jnp.einsum('bij,bjg->big', alpha, Hk))
        stacked = jnp.stack(heads, axis=-1)                          # [B, L, F_out, K]
        if li == num_layers - 1:
            h = jnp.sum(stacked, axis=-1)
        else:
            h = stacked.reshape(B, L, F_out * K)                     # torch view: f*K + k
    h = h.reshape(B, L, n_target_feat, horizon)
    return jnp.transpose(h, (0, 3, 1, 2)).reshape(B, horizon, L * n_target_feat)


def _init_layer_params(key, K, f_in, f_out):
    ks = jax.random.split(key, 5)
    W = jax.random.normal(ks[0], (K, f_in, f_out), jnp.float32) * 0.2
    b = jax.random.normal(ks[1], (K, 1, f_out), jnp.float32) * 0.1
    a_src = jax.random.normal(ks[2], (K, 1, f_out), jnp.float32) * 0.2
    a_dst = jax.random.normal(ks[3], (K, 1, f_out), jnp.float32) * 0.2
    b_att = jax.random.normal(ks[4], (K,), jnp.float32) * 0.1
    return (W, b, a_src, a_dst, b_att)


if __name__ == "__main__":
    # Predictor configuration (deterministic, synthetic):
    #   num_links=8, num_input_features=4, hidden_sizes=[8], K=[2, 2],
    #   num_layers=2, target_feature=['speed'], horizon=3, negative_slope=0.2
    B = 2
    L = 8                 # num_links
    F0 = 4                # num_input_features
    hidden = 8
    K = (2, 2)
    horizon = 3
    n_target_feat = 1
    output_size = n_target_feat * horizon
    negative_slope = 0.2

    key = jax.random.PRNGKey(0)
    k_x, k_l0, k_out = jax.random.split(key, 3)

    # Deterministic adjacency: ring + self loops (every link has >=1 neighbor).
    eye = jnp.eye(L, dtype=jnp.float32)
    adj = jnp.minimum(eye + jnp.roll(eye, 1, axis=1) + jnp.roll(eye, -1, axis=1), 1.0)

    # Parameters: hidden GAT layer (4 -> 8, K=2), output GAT layer (16 -> 3, K=2).
    params = [
        _init_layer_params(k_l0, K[0], F0, hidden),
        _init_layer_params(k_out, K[1], hidden * K[0], output_size),
    ]
    packed = pack_gat_params(params)

    x = jax.random.normal(k_x, (B, F0, L), jnp.float32)

    fwd = jax.jit(functools.partial(
        gat_model_forward,
        negative_slope=negative_slope,
        horizon=horizon,
        n_target_feat=n_target_feat,
    ))

    out = jax.block_until_ready(fwd(x, packed, adj))
    assert out.shape == (B, horizon, L * n_target_feat), out.shape
    assert bool(jnp.all(jnp.isfinite(out)))

    ref = gat_reference(x, params, adj, negative_slope=negative_slope,
                        horizon=horizon, n_target_feat=n_target_feat)
    np.testing.assert_allclose(np.asarray(out), np.asarray(ref), rtol=2e-2, atol=2e-2)

    print("KERNEL_OK")
</pallas_src>

<mosaic_0001>
module attributes {stable_mosaic.version = 11 : i64} {
  func.func @kernel(%arg0: memref<16x4xf32, #tpu.memory_space<vmem>>, %arg1: memref<8x8xf32, #tpu.memory_space<vmem>>, %arg2: memref<4x16xf32, #tpu.memory_space<vmem>>, %arg3: memref<1x16xf32, #tpu.memory_space<vmem>>, %arg4: memref<16x4xf32, #tpu.memory_space<vmem>>, %arg5: memref<1x4xf32, #tpu.memory_space<vmem>>, %arg6: memref<16x6xf32, #tpu.memory_space<vmem>>, %arg7: memref<1x6xf32, #tpu.memory_space<vmem>>, %arg8: memref<6x4xf32, #tpu.memory_space<vmem>>, %arg9: memref<1x4xf32, #tpu.memory_space<vmem>>, %arg10: memref<16x3xf32, #tpu.memory_space<vmem>>) attributes {dimension_semantics = [], scalar_prefetch = 0 : i64, scratch_operands = 0 : i64, tpu.core_type = #tpu.core_type<tc>} {
    %c0 = arith.constant 0 : index
    %c0_0 = arith.constant 0 : index
    %0 = vector.load %arg1[%c0, %c0_0] : memref<8x8xf32, #tpu.memory_space<vmem>>, vector<8x8xf32>
    %cst = arith.constant 0.000000e+00 : f32
    %1 = vector.broadcast %cst : f32 to vector<8x8xf32>
    %2 = arith.cmpf ogt, %0, %1 : vector<8x8xf32>
    %3 = arith.extui %2 : vector<8x8xi1> to vector<8x8xi32>
    %4 = arith.sitofp %3 : vector<8x8xi32> to vector<8x8xf32>
    %c0_1 = arith.constant 0 : index
    %c0_2 = arith.constant 0 : index
    %5 = vector.load %arg0[%c0_1, %c0_2] : memref<16x4xf32, #tpu.memory_space<vmem>>, vector<16x4xf32>
    %c0_3 = arith.constant 0 : index
    %c0_4 = arith.constant 0 : index
    %6 = vector.load %arg2[%c0_3, %c0_4] : memref<4x16xf32, #tpu.memory_space<vmem>>, vector<4x16xf32>
    %c0_5 = arith.constant 0 : index
    %c0_6 = arith.constant 0 : index
    %7 = vector.load %arg3[%c0_5, %c0_6] : memref<1x16xf32, #tpu.memory_space<vmem>>, vector<1x16xf32>
    %c0_7 = arith.constant 0 : index
    %c0_8 = arith.constant 0 : index
    %8 = vector.load %arg4[%c0_7, %c0_8] : memref<16x4xf32, #tpu.memory_space<vmem>>, vector<16x4xf32>
    %c0_9 = arith.constant 0 : index
    %c0_10 = arith.constant 0 : index
    %9 = vector.load %arg5[%c0_9, %c0_10] : memref<1x4xf32, #tpu.memory_space<vmem>>, vector<1x4xf32>
    %cst_11 = arith.constant dense<0.000000e+00> : vector<16x16xf32>
    %10 = tpu.matmul %5, %6, %cst_11 {dimension_numbers = #tpu.dot_dimension_numbers<[1], [0], [0], [1], [0, 0, 1, 1], [], []>} : vector<16x4xf32>, vector<4x16xf32>, vector<16x16xf32> -> vector<16x16xf32>
    %11 = vector.broadcast %7 : vector<1x16xf32> to vector<16x16xf32>
    %12 = arith.addf %10, %11 : vector<16x16xf32>
    %cst_12 = arith.constant dense<0.000000e+00> : vector<16x4xf32>
    %13 = tpu.matmul %12, %8, %cst_12 {dimension_numbers = #tpu.dot_dimension_numbers<[1], [0], [0], [1], [0, 0, 1, 1], [], []>} : vector<16x16xf32>, vector<16x4xf32>, vector<16x4xf32> -> vector<16x4xf32>
    %14 = vector.broadcast %9 : vector<1x4xf32> to vector<16x4xf32>
    %15 = arith.addf %13, %14 : vector<16x4xf32>
    %16 = vector.extract_strided_slice %15 {offsets = [0, 0], sizes = [16, 2], strides = [1, 1]} : vector<16x4xf32> to vector<16x2xf32>
    %17 = vector.extract_strided_slice %15 {offsets = [0, 2], sizes = [16, 2], strides = [1, 1]} : vector<16x4xf32> to vector<16x2xf32>
    %18 = tpu.transpose %17, [1, 0] : vector<16x2xf32> -> vector<2x16xf32>
    %19 = vector.extract_strided_slice %16 {offsets = [0, 0], sizes = [8, 1], strides = [1, 1]} : vector<16x2xf32> to vector<8x1xf32>
    %20 = vector.extract_strided_slice %18 {offsets = [0, 0], sizes = [1, 8], strides = [1, 1]} : vector<2x16xf32> to vector<1x8xf32>
    %21 = vector.broadcast %19 : vector<8x1xf32> to vector<8x8xf32>
    %22 = vector.broadcast %20 : vector<1x8xf32> to vector<8x8xf32>
    %23 = arith.addf %21, %22 : vector<8x8xf32>
    %cst_13 = arith.constant 0.000000e+00 : f32
    %24 = vector.broadcast %cst_13 : f32 to vector<8x8xf32>
    %25 = arith.cmpf oge, %23, %24 : vector<8x8xf32>
    %cst_14 = arith.constant 2.000000e-01 : f32
    %26 = vector.broadcast %cst_14 : f32 to vector<8x8xf32>
    %27 = arith.mulf %26, %23 : vector<8x8xf32>
    %28 = arith.select %25, %23, %27 : vector<8x8xi1>, vector<8x8xf32>
    %cst_15 = arith.constant -1.000000e+30 : f32
    %29 = vector.broadcast %cst_15 : f32 to vector<8x8xf32>
    %30 = arith.select %2, %28, %29 : vector<8x8xi1>, vector<8x8xf32>
    %cst_16 = arith.constant dense<0xFF800000> : vector<8xf32>
    %31 = vector.multi_reduction <maximumf>, %30, %cst_16 [1] : vector<8x8xf32> to vector<8xf32>
    %32 = vector.shape_cast %31 : vector<8xf32> to vector<8x1xf32>
    %33 = vector.broadcast %32 : vector<8x1xf32> to vector<8x8xf32>
    %34 = arith.subf %30, %33 : vector<8x8xf32>
    %35 = math.exp %34 : vector<8x8xf32>
    %36 = arith.mulf %35, %4 : vector<8x8xf32>
    %cst_17 = arith.constant dense<0.000000e+00> : vector<8xf32>
    %37 = vector.multi_reduction <add>, %36, %cst_17 [1] : vector<8x8xf32> to vector<8xf32>
    %38 = vector.shape_cast %37 : vector<8xf32> to vector<8x1xf32>
    %cst_18 = arith.constant 1.000000e-30 : f32
    %39 = vector.broadcast %cst_18 : f32 to vector<8x1xf32>
    %40 = arith.maximumf %38, %39 : vector<8x1xf32>
    %41 = vector.broadcast %40 : vector<8x1xf32> to vector<8x8xf32>
    %42 = arith.divf %36, %41 : vector<8x8xf32>
    %43 = vector.extract_strided_slice %12 {offsets = [0, 0], sizes = [8, 8], strides = [1, 1]} : vector<16x16xf32> to vector<8x8xf32>
    %cst_19 = arith.constant dense<0.000000e+00> : vector<8x8xf32>
    %44 = tpu.matmul %42, %43, %cst_19 {dimension_numbers = #tpu.dot_dimension_numbers<[1], [0], [0], [1], [0, 0, 1, 1], [], []>} : vector<8x8xf32>, vector<8x8xf32>, vector<8x8xf32> -> vector<8x8xf32>
    %45 = vector.extract_strided_slice %16 {offsets = [0, 1], sizes = [8, 1], strides = [1, 1]} : vector<16x2xf32> to vector<8x1xf32>
    %46 = vector.extract_strided_slice %18 {offsets = [1, 0], sizes = [1, 8], strides = [1, 1]} : vector<2x16xf32> to vector<1x8xf32>
    %47 = vector.broadcast %45 : vector<8x1xf32> to vector<8x8xf32>
    %48 = vector.broadcast %46 : vector<1x8xf32> to vector<8x8xf32>
    %49 = arith.addf %47, %48 : vector<8x8xf32>
    %cst_20 = arith.constant 0.000000e+00 : f32
    %50 = vector.broadcast %cst_20 : f32 to vector<8x8xf32>
    %51 = arith.cmpf oge, %49, %50 : vector<8x8xf32>
    %cst_21 = arith.constant 2.000000e-01 : f32
    %52 = vector.broadcast %cst_21 : f32 to vector<8x8xf32>
    %53 = arith.mulf %52, %49 : vector<8x8xf32>
    %54 = arith.select %51, %49, %53 : vector<8x8xi1>, vector<8x8xf32>
    %cst_22 = arith.constant -1.000000e+30 : f32
    %55 = vector.broadcast %cst_22 : f32 to vector<8x8xf32>
    %56 = arith.select %2, %54, %55 : vector<8x8xi1>, vector<8x8xf32>
    %cst_23 = arith.constant dense<0xFF800000> : vector<8xf32>
    %57 = vector.multi_reduction <maximumf>, %56, %cst_23 [1] : vector<8x8xf32> to vector<8xf32>
    %58 = vector.shape_cast %57 : vector<8xf32> to vector<8x1xf32>
    %59 = vector.broadcast %58 : vector<8x1xf32> to vector<8x8xf32>
    %60 = arith.subf %56, %59 : vector<8x8xf32>
    %61 = math.exp %60 : vector<8x8xf32>
    %62 = arith.mulf %61, %4 : vector<8x8xf32>
    %cst_24 = arith.constant dense<0.000000e+00> : vector<8xf32>
    %63 = vector.multi_reduction <add>, %62, %cst_24 [1] : vector<8x8xf32> to vector<8xf32>
    %64 = vector.shape_cast %63 : vector<8xf32> to vector<8x1xf32>
    %cst_25 = arith.constant 1.000000e-30 : f32
    %65 = vector.broadcast %cst_25 : f32 to vector<8x1xf32>
    %66 = arith.maximumf %64, %65 : vector<8x1xf32>
    %67 = vector.broadcast %66 : vector<8x1xf32> to vector<8x8xf32>
    %68 = arith.divf %62, %67 : vector<8x8xf32>
    %69 = vector.extract_strided_slice %12 {offsets = [0, 8], sizes = [8, 8], strides = [1, 1]} : vector<16x16xf32> to vector<8x8xf32>
    %cst_26 = arith.constant dense<0.000000e+00> : vector<8x8xf32>
    %70 = tpu.matmul %68, %69, %cst_26 {dimension_numbers = #tpu.dot_dimension_numbers<[1], [0], [0], [1], [0, 0, 1, 1], [], []>} : vector<8x8xf32>, vector<8x8xf32>, vector<8x8xf32> -> vector<8x8xf32>
    %71 = tpu.concatenate %44, %70 in 1 : vector<8x8xf32>, vector<8x8xf32> -> vector<8x16xf32>
    %72 = vector.extract_strided_slice %16 {offsets = [8, 0], sizes = [8, 1], strides = [1, 1]} : vector<16x2xf32> to vector<8x1xf32>
    %73 = vector.extract_strided_slice %18 {offsets = [0, 8], sizes = [1, 8], strides = [1, 1]} : vector<2x16xf32> to vector<1x8xf32>
    %74 = vector.broadcast %72 : vector<8x1xf32> to vector<8x8xf32>
    %75 = vector.broadcast %73 : vector<1x8xf32> to vector<8x8xf32>
    %76 = arith.addf %74, %75 : vector<8x8xf32>
    %cst_27 = arith.constant 0.000000e+00 : f32
    %77 = vector.broadcast %cst_27 : f32 to vector<8x8xf32>
    %78 = arith.cmpf oge, %76, %77 : vector<8x8xf32>
    %cst_28 = arith.constant 2.000000e-01 : f32
    %79 = vector.broadcast %cst_28 : f32 to vector<8x8xf32>
    %80 = arith.mulf %79, %76 : vector<8x8xf32>
    %81 = arith.select %78, %76, %80 : vector<8x8xi1>, vector<8x8xf32>
    %cst_29 = arith.constant -1.000000e+30 : f32
    %82 = vector.broadcast %cst_29 : f32 to vector<8x8xf32>
    %83 = arith.select %2, %81, %82 : vector<8x8xi1>, vector<8x8xf32>
    %cst_30 = arith.constant dense<0xFF800000> : vector<8xf32>
    %84 = vector.multi_reduction <maximumf>, %83, %cst_30 [1] : vector<8x8xf32> to vector<8xf32>
    %85 = vector.shape_cast %84 : vector<8xf32> to vector<8x1xf32>
    %86 = vector.broadcast %85 : vector<8x1xf32> to vector<8x8xf32>
    %87 = arith.subf %83, %86 : vector<8x8xf32>
    %88 = math.exp %87 : vector<8x8xf32>
    %89 = arith.mulf %88, %4 : vector<8x8xf32>
    %cst_31 = arith.constant dense<0.000000e+00> : vector<8xf32>
    %90 = vector.multi_reduction <add>, %89, %cst_31 [1] : vector<8x8xf32> to vector<8xf32>
    %91 = vector.shape_cast %90 : vector<8xf32> to vector<8x1xf32>
    %cst_32 = arith.constant 1.000000e-30 : f32
    %92 = vector.broadcast %cst_32 : f32 to vector<8x1xf32>
    %93 = arith.maximumf %91, %92 : vector<8x1xf32>
    %94 = vector.broadcast %93 : vector<8x1xf32> to vector<8x8xf32>
    %95 = arith.divf %89, %94 : vector<8x8xf32>
    %96 = vector.extract_strided_slice %12 {offsets = [8, 0], sizes = [8, 8], strides = [1, 1]} : vector<16x16xf32> to vector<8x8xf32>
    %cst_33 = arith.constant dense<0.000000e+00> : vector<8x8xf32>
    %97 = tpu.matmul %95, %96, %cst_33 {dimension_numbers = #tpu.dot_dimension_numbers<[1], [0], [0], [1], [0, 0, 1, 1], [], []>} : vector<8x8xf32>, vector<8x8xf32>, vector<8x8xf32> -> vector<8x8xf32>
    %98 = vector.extract_strided_slice %16 {offsets = [8, 1], sizes = [8, 1], strides = [1, 1]} : vector<16x2xf32> to vector<8x1xf32>
    %99 = vector.extract_strided_slice %18 {offsets = [1, 8], sizes = [1, 8], strides = [1, 1]} : vector<2x16xf32> to vector<1x8xf32>
    %100 = vector.broadcast %98 : vector<8x1xf32> to vector<8x8xf32>
    %101 = vector.broadcast %99 : vector<1x8xf32> to vector<8x8xf32>
    %102 = arith.addf %100, %101 : vector<8x8xf32>
    %cst_34 = arith.constant 0.000000e+00 : f32
    %103 = vector.broadcast %cst_34 : f32 to vector<8x8xf32>
    %104 = arith.cmpf oge, %102, %103 : vector<8x8xf32>
    %cst_35 = arith.constant 2.000000e-01 : f32
    %105 = vector.broadcast %cst_35 : f32 to vector<8x8xf32>
    %106 = arith.mulf %105, %102 : vector<8x8xf32>
    %107 = arith.select %104, %102, %106 : vector<8x8xi1>, vector<8x8xf32>
    %cst_36 = arith.constant -1.000000e+30 : f32
    %108 = vector.broadcast %cst_36 : f32 to vector<8x8xf32>
    %109 = arith.select %2, %107, %108 : vector<8x8xi1>, vector<8x8xf32>
    %cst_37 = arith.constant dense<0xFF800000> : vector<8xf32>
    %110 = vector.multi_reduction <maximumf>, %109, %cst_37 [1] : vector<8x8xf32> to vector<8xf32>
    %111 = vector.shape_cast %110 : vector<8xf32> to vector<8x1xf32>
    %112 = vector.broadcast %111 : vector<8x1xf32> to vector<8x8xf32>
    %113 = arith.subf %109, %112 : vector<8x8xf32>
    %114 = math.exp %113 : vector<8x8xf32>
    %115 = arith.mulf %114, %4 : vector<8x8xf32>
    %cst_38 = arith.constant dense<0.000000e+00> : vector<8xf32>
    %116 = vector.multi_reduction <add>, %115, %cst_38 [1] : vector<8x8xf32> to vector<8xf32>
    %117 = vector.shape_cast %116 : vector<8xf32> to vector<8x1xf32>
    %cst_39 = arith.constant 1.000000e-30 : f32
    %118 = vector.broadcast %cst_39 : f32 to vector<8x1xf32>
    %119 = arith.maximumf %117, %118 : vector<8x1xf32>
    %120 = vector.broadcast %119 : vector<8x1xf32> to vector<8x8xf32>
    %121 = arith.divf %115, %120 : vector<8x8xf32>
    %122 = vector.extract_strided_slice %12 {offsets = [8, 8], sizes = [8, 8], strides = [1, 1]} : vector<16x16xf32> to vector<8x8xf32>
    %cst_40 = arith.constant dense<0.000000e+00> : vector<8x8xf32>
    %123 = tpu.matmul %121, %122, %cst_40 {dimension_numbers = #tpu.dot_dimension_numbers<[1], [0], [0], [1], [0, 0, 1, 1], [], []>} : vector<8x8xf32>, vector<8x8xf32>, vector<8x8xf32> -> vector<8x8xf32>
    %124 = tpu.concatenate %97, %123 in 1 : vector<8x8xf32>, vector<8x8xf32> -> vector<8x16xf32>
    %125 = tpu.concatenate %71, %124 in 0 : vector<8x16xf32>, vector<8x16xf32> -> vector<16x16xf32>
    %c0_41 = arith.constant 0 : index
    %c0_42 = arith.constant 0 : index
    %126 = vector.load %arg6[%c0_41, %c0_42] : memref<16x6xf32, #tpu.memory_space<vmem>>, vector<16x6xf32>
    %c0_43 = arith.constant 0 : index
    %c0_44 = arith.constant 0 : index
    %127 = vector.load %arg7[%c0_43, %c0_44] : memref<1x6xf32, #tpu.memory_space<vmem>>, vector<1x6xf32>
    %c0_45 = arith.constant 0 : index
    %c0_46 = arith.constant 0 : index
    %128 = vector.load %arg8[%c0_45, %c0_46] : memref<6x4xf32, #tpu.memory_space<vmem>>, vector<6x4xf32>
    %c0_47 = arith.constant 0 : index
    %c0_48 = arith.constant 0 : index
    %129 = vector.load %arg9[%c0_47, %c0_48] : memref<1x4xf32, #tpu.memory_space<vmem>>, vector<1x4xf32>
    %cst_49 = arith.constant dense<0.000000e+00> : vector<16x6xf32>
    %130 = tpu.matmul %125, %126, %cst_49 {dimension_numbers = #tpu.dot_dimension_numbers<[1], [0], [0], [1], [0, 0, 1, 1], [], []>} : vector<16x16xf32>, vector<16x6xf32>, vector<16x6xf32> -> vector<16x6xf32>
    %131 = vector.broadcast %127 : vector<1x6xf32> to vector<16x6xf32>
    %132 = arith.addf %130, %131 : vector<16x6xf32>
    %cst_50 = arith.constant dense<0.000000e+00> : vector<16x4xf32>
    %133 = tpu.matmul %132, %128, %cst_50 {dimension_numbers = #tpu.dot_dimension_numbers<[1], [0], [0], [1], [0, 0, 1, 1], [], []>} : vector<16x6xf32>, vector<6x4xf32>, vector<16x4xf32> -> vector<16x4xf32>
    %134 = vector.broadcast %129 : vector<1x4xf32> to vector<16x4xf32>
    %135 = arith.addf %133, %134 : vector<16x4xf32>
    %136 = vector.extract_strided_slice %135 {offsets = [0, 0], sizes = [16, 2], strides = [1, 1]} : vector<16x4xf32> to vector<16x2xf32>
    %137 = vector.extract_strided_slice %135 {offsets = [0, 2], sizes = [16, 2], strides = [1, 1]} : vector<16x4xf32> to vector<16x2xf32>
    %138 = tpu.transpose %137, [1, 0] : vector<16x2xf32> -> vector<2x16xf32>
    %139 = vector.extract_strided_slice %136 {offsets = [0, 0], sizes = [8, 1], strides = [1, 1]} : vector<16x2xf32> to vector<8x1xf32>
    %140 = vector.extract_strided_slice %138 {offsets = [0, 0], sizes = [1, 8], strides = [1, 1]} : vector<2x16xf32> to vector<1x8xf32>
    %141 = vector.broadcast %139 : vector<8x1xf32> to vector<8x8xf32>
    %142 = vector.broadcast %140 : vector<1x8xf32> to vector<8x8xf32>
    %143 = arith.addf %141, %142 : vector<8x8xf32>
    %cst_51 = arith.constant 0.000000e+00 : f32
    %144 = vector.broadcast %cst_51 : f32 to vector<8x8xf32>
    %145 = arith.cmpf oge, %143, %144 : vector<8x8xf32>
    %cst_52 = arith.constant 2.000000e-01 : f32
    %146 = vector.broadcast %cst_52 : f32 to vector<8x8xf32>
    %147 = arith.mulf %146, %143 : vector<8x8xf32>
    %148 = arith.select %145, %143, %147 : vector<8x8xi1>, vector<8x8xf32>
    %cst_53 = arith.constant -1.000000e+30 : f32
    %149 = vector.broadcast %cst_53 : f32 to vector<8x8xf32>
    %150 = arith.select %2, %148, %149 : vector<8x8xi1>, vector<8x8xf32>
    %cst_54 = arith.constant dense<0xFF800000> : vector<8xf32>
    %151 = vector.multi_reduction <maximumf>, %150, %cst_54 [1] : vector<8x8xf32> to vector<8xf32>
    %152 = vector.shape_cast %151 : vector<8xf32> to vector<8x1xf32>
    %153 = vector.broadcast %152 : vector<8x1xf32> to vector<8x8xf32>
    %154 = arith.subf %150, %153 : vector<8x8xf32>
    %155 = math.exp %154 : vector<8x8xf32>
    %156 = arith.mulf %155, %4 : vector<8x8xf32>
    %cst_55 = arith.constant dense<0.000000e+00> : vector<8xf32>
    %157 = vector.multi_reduction <add>, %156, %cst_55 [1] : vector<8x8xf32> to vector<8xf32>
    %158 = vector.shape_cast %157 : vector<8xf32> to vector<8x1xf32>
    %cst_56 = arith.constant 1.000000e-30 : f32
    %159 = vector.broadcast %cst_56 : f32 to vector<8x1xf32>
    %160 = arith.maximumf %158, %159 : vector<8x1xf32>
    %161 = vector.broadcast %160 : vector<8x1xf32> to vector<8x8xf32>
    %162 = arith.divf %156, %161 : vector<8x8xf32>
    %163 = vector.extract_strided_slice %132 {offsets = [0, 0], sizes = [8, 3], strides = [1, 1]} : vector<16x6xf32> to vector<8x3xf32>
    %cst_57 = arith.constant dense<0.000000e+00> : vector<8x3xf32>
    %164 = tpu.matmul %162, %163, %cst_57 {dimension_numbers = #tpu.dot_dimension_numbers<[1], [0], [0], [1], [0, 0, 1, 1], [], []>} : vector<8x8xf32>, vector<8x3xf32>, vector<8x3xf32> -> vector<8x3xf32>
    %165 = vector.extract_strided_slice %136 {offsets = [0, 1], sizes = [8, 1], strides = [1, 1]} : vector<16x2xf32> to vector<8x1xf32>
    %166 = vector.extract_strided_slice %138 {offsets = [1, 0], sizes = [1, 8], strides = [1, 1]} : vector<2x16xf32> to vector<1x8xf32>
    %167 = vector.broadcast %165 : vector<8x1xf32> to vector<8x8xf32>
    %168 = vector.broadcast %166 : vector<1x8xf32> to vector<8x8xf32>
    %169 = arith.addf %167, %168 : vector<8x8xf32>
    %cst_58 = arith.constant 0.000000e+00 : f32
    %170 = vector.broadcast %cst_58 : f32 to vector<8x8xf32>
    %171 = arith.cmpf oge, %169, %170 : vector<8x8xf32>
    %cst_59 = arith.constant 2.000000e-01 : f32
    %172 = vector.broadcast %cst_59 : f32 to vector<8x8xf32>
    %173 = arith.mulf %172, %169 : vector<8x8xf32>
    %174 = arith.select %171, %169, %173 : vector<8x8xi1>, vector<8x8xf32>
    %cst_60 = arith.constant -1.000000e+30 : f32
    %175 = vector.broadcast %cst_60 : f32 to vector<8x8xf32>
    %176 = arith.select %2, %174, %175 : vector<8x8xi1>, vector<8x8xf32>
    %cst_61 = arith.constant dense<0xFF800000> : vector<8xf32>
    %177 = vector.multi_reduction <maximumf>, %176, %cst_61 [1] : vector<8x8xf32> to vector<8xf32>
    %178 = vector.shape_cast %177 : vector<8xf32> to vector<8x1xf32>
    %179 = vector.broadcast %178 : vector<8x1xf32> to vector<8x8xf32>
    %180 = arith.subf %176, %179 : vector<8x8xf32>
    %181 = math.exp %180 : vector<8x8xf32>
    %182 = arith.mulf %181, %4 : vector<8x8xf32>
    %cst_62 = arith.constant dense<0.000000e+00> : vector<8xf32>
    %183 = vector.multi_reduction <add>, %182, %cst_62 [1] : vector<8x8xf32> to vector<8xf32>
    %184 = vector.shape_cast %183 : vector<8xf32> to vector<8x1xf32>
    %cst_63 = arith.constant 1.000000e-30 : f32
    %185 = vector.broadcast %cst_63 : f32 to vector<8x1xf32>
    %186 = arith.maximumf %184, %185 : vector<8x1xf32>
    %187 = vector.broadcast %186 : vector<8x1xf32> to vector<8x8xf32>
    %188 = arith.divf %182, %187 : vector<8x8xf32>
    %189 = vector.extract_strided_slice %132 {offsets = [0, 3], sizes = [8, 3], strides = [1, 1]} : vector<16x6xf32> to vector<8x3xf32>
    %cst_64 = arith.constant dense<0.000000e+00> : vector<8x3xf32>
    %190 = tpu.matmul %188, %189, %cst_64 {dimension_numbers = #tpu.dot_dimension_numbers<[1], [0], [0], [1], [0, 0, 1, 1], [], []>} : vector<8x8xf32>, vector<8x3xf32>, vector<8x3xf32> -> vector<8x3xf32>
    %191 = arith.addf %164, %190 : vector<8x3xf32>
    %192 = vector.extract_strided_slice %136 {offsets = [8, 0], sizes = [8, 1], strides = [1, 1]} : vector<16x2xf32> to vector<8x1xf32>
    %193 = vector.extract_strided_slice %138 {offsets = [0, 8], sizes = [1, 8], strides = [1, 1]} : vector<2x16xf32> to vector<1x8xf32>
    %194 = vector.broadcast %192 : vector<8x1xf32> to vector<8x8xf32>
    %195 = vector.broadcast %193 : vector<1x8xf32> to vector<8x8xf32>
    %196 = arith.addf %194, %195 : vector<8x8xf32>
    %cst_65 = arith.constant 0.000000e+00 : f32
    %197 = vector.broadcast %cst_65 : f32 to vector<8x8xf32>
    %198 = arith.cmpf oge, %196, %197 : vector<8x8xf32>
    %cst_66 = arith.constant 2.000000e-01 : f32
    %199 = vector.broadcast %cst_66 : f32 to vector<8x8xf32>
    %200 = arith.mulf %199, %196 : vector<8x8xf32>
    %201 = arith.select %198, %196, %200 : vector<8x8xi1>, vector<8x8xf32>
    %cst_67 = arith.constant -1.000000e+30 : f32
    %202 = vector.broadcast %cst_67 : f32 to vector<8x8xf32>
    %203 = arith.select %2, %201, %202 : vector<8x8xi1>, vector<8x8xf32>
    %cst_68 = arith.constant dense<0xFF800000> : vector<8xf32>
    %204 = vector.multi_reduction <maximumf>, %203, %cst_68 [1] : vector<8x8xf32> to vector<8xf32>
    %205 = vector.shape_cast %204 : vector<8xf32> to vector<8x1xf32>
    %206 = vector.broadcast %205 : vector<8x1xf32> to vector<8x8xf32>
    %207 = arith.subf %203, %206 : vector<8x8xf32>
    %208 = math.exp %207 : vector<8x8xf32>
    %209 = arith.mulf %208, %4 : vector<8x8xf32>
    %cst_69 = arith.constant dense<0.000000e+00> : vector<8xf32>
    %210 = vector.multi_reduction <add>, %209, %cst_69 [1] : vector<8x8xf32> to vector<8xf32>
    %211 = vector.shape_cast %210 : vector<8xf32> to vector<8x1xf32>
    %cst_70 = arith.constant 1.000000e-30 : f32
    %212 = vector.broadcast %cst_70 : f32 to vector<8x1xf32>
    %213 = arith.maximumf %211, %212 : vector<8x1xf32>
    %214 = vector.broadcast %213 : vector<8x1xf32> to vector<8x8xf32>
    %215 = arith.divf %209, %214 : vector<8x8xf32>
    %216 = vector.extract_strided_slice %132 {offsets = [8, 0], sizes = [8, 3], strides = [1, 1]} : vector<16x6xf32> to vector<8x3xf32>
    %cst_71 = arith.constant dense<0.000000e+00> : vector<8x3xf32>
    %217 = tpu.matmul %215, %216, %cst_71 {dimension_numbers = #tpu.dot_dimension_numbers<[1], [0], [0], [1], [0, 0, 1, 1], [], []>} : vector<8x8xf32>, vector<8x3xf32>, vector<8x3xf32> -> vector<8x3xf32>
    %218 = vector.extract_strided_slice %136 {offsets = [8, 1], sizes = [8, 1], strides = [1, 1]} : vector<16x2xf32> to vector<8x1xf32>
    %219 = vector.extract_strided_slice %138 {offsets = [1, 8], sizes = [1, 8], strides = [1, 1]} : vector<2x16xf32> to vector<1x8xf32>
    %220 = vector.broadcast %218 : vector<8x1xf32> to vector<8x8xf32>
    %221 = vector.broadcast %219 : vector<1x8xf32> to vector<8x8xf32>
    %222 = arith.addf %220, %221 : vector<8x8xf32>
    %cst_72 = arith.constant 0.000000e+00 : f32
    %223 = vector.broadcast %cst_72 : f32 to vector<8x8xf32>
    %224 = arith.cmpf oge, %222, %223 : vector<8x8xf32>
    %cst_73 = arith.constant 2.000000e-01 : f32
    %225 = vector.broadcast %cst_73 : f32 to vector<8x8xf32>
    %226 = arith.mulf %225, %222 : vector<8x8xf32>
    %227 = arith.select %224, %222, %226 : vector<8x8xi1>, vector<8x8xf32>
    %cst_74 = arith.constant -1.000000e+30 : f32
    %228 = vector.broadcast %cst_74 : f32 to vector<8x8xf32>
    %229 = arith.select %2, %227, %228 : vector<8x8xi1>, vector<8x8xf32>
    %cst_75 = arith.constant dense<0xFF800000> : vector<8xf32>
    %230 = vector.multi_reduction <maximumf>, %229, %cst_75 [1] : vector<8x8xf32> to vector<8xf32>
    %231 = vector.shape_cast %230 : vector<8xf32> to vector<8x1xf32>
    %232 = vector.broadcast %231 : vector<8x1xf32> to vector<8x8xf32>
    %233 = arith.subf %229, %232 : vector<8x8xf32>
    %234 = math.exp %233 : vector<8x8xf32>
    %235 = arith.mulf %234, %4 : vector<8x8xf32>
    %cst_76 = arith.constant dense<0.000000e+00> : vector<8xf32>
    %236 = vector.multi_reduction <add>, %235, %cst_76 [1] : vector<8x8xf32> to vector<8xf32>
    %237 = vector.shape_cast %236 : vector<8xf32> to vector<8x1xf32>
    %cst_77 = arith.constant 1.000000e-30 : f32
    %238 = vector.broadcast %cst_77 : f32 to vector<8x1xf32>
    %239 = arith.maximumf %237, %238 : vector<8x1xf32>
    %240 = vector.broadcast %239 : vector<8x1xf32> to vector<8x8xf32>
    %241 = arith.divf %235, %240 : vector<8x8xf32>
    %242 = vector.extract_strided_slice %132 {offsets = [8, 3], sizes = [8, 3], strides = [1, 1]} : vector<16x6xf32> to vector<8x3xf32>
    %cst_78 = arith.constant dense<0.000000e+00> : vector<8x3xf32>
    %243 = tpu.matmul %241, %242, %cst_78 {dimension_numbers = #tpu.dot_dimension_numbers<[1], [0], [0], [1], [0, 0, 1, 1], [], []>} : vector<8x8xf32>, vector<8x3xf32>, vector<8x3xf32> -> vector<8x3xf32>
    %244 = arith.addf %217, %243 : vector<8x3xf32>
    %245 = tpu.concatenate %191, %244 in 0 : vector<8x3xf32>, vector<8x3xf32> -> vector<16x3xf32>
    %c0_79 = arith.constant 0 : index
    %c0_80 = arith.constant 0 : index
    %246 = vector.load %arg10[%c0_79, %c0_80] : memref<16x3xf32, #tpu.memory_space<vmem>>, vector<16x3xf32>
    tpu.vector_store %arg10[%c0_79, %c0_80], %245 {strides = array<i32>} : memref<16x3xf32, #tpu.memory_space<vmem>>, vector<16x3xf32>,
    return
  }
}

</mosaic_0001>

<llo_original>
// kernel: gat_model_forward.1
$region0: #{gat_model_forward.1}
  #allocation0 [shape = 'u32[]', space=smem, size = 0x4, offset = 0x4, fixed_abs, tag = 'smem constant byte address 0x4 - core index']
  #allocation1 [shape = 'u32[144,128]{1,0:T(1,128)}', space=vmem, size = 0x12000, scoped, tag = 'internal scratch']
  %s0 = inlined_call_operand.vmem [shape: f32[16,4], index: 0, kind: input, shape index: {}]
  %s1 = inlined_call_operand.vmem [shape: f32[8,8], index: 1, kind: input, shape index: {}]
  %s2 = inlined_call_operand.vmem [shape: f32[4,16], index: 2, kind: input, shape index: {}]
  %s3 = inlined_call_operand.vmem [shape: f32[1,16], index: 3, kind: input, shape index: {}]
  %s4 = inlined_call_operand.vmem [shape: f32[16,4], index: 4, kind: input, shape index: {}]
  %s5 = inlined_call_operand.vmem [shape: f32[1,4], index: 5, kind: input, shape index: {}]
  %s6 = inlined_call_operand.vmem [shape: f32[16,6], index: 6, kind: input, shape index: {}]
  %s7 = inlined_call_operand.vmem [shape: f32[1,6], index: 7, kind: input, shape index: {}]
  %s8 = inlined_call_operand.vmem [shape: f32[6,4], index: 8, kind: input, shape index: {}]
  %s9 = inlined_call_operand.vmem [shape: f32[1,4], index: 9, kind: input, shape index: {}]
  %s10 = inlined_call_operand.vmem [shape: f32[16,3], index: 10, kind: output, shape index: {}]
  %s11 = sld [smem:[#allocation0]]
  $region50: #{gat_model_forward.1} parent=0
    _
  %s13 = ssub.s32 1, %s11
  %s14 = scalar_select 0, %s13, %s11
  // Predicated region
  $region2: #{gat_model_forward.1} parent=0 // pred_check
    _
  $region3: #{gat_model_forward.1} parent=0 // pred_check_branch
    %16 = sbr.rel (0) target = $region5
  $region4: #{gat_model_forward.1} parent=0 // pred_region
    _
  $region5: #{gat_model_forward.1} parent=0 // pred_fallthru
    _
  // Predicated region
  $region6: #{gat_model_forward.1} parent=0 // pred_check
    _
  $region7: #{gat_model_forward.1} parent=0 // pred_check_branch
    %18 = sbr.rel (0) target = $region9
  $region8: #{gat_model_forward.1} parent=0 // pred_region
    _
  $region9: #{gat_model_forward.1} parent=0 // pred_fallthru
    _
  // Predicated region
  $region10: #{gat_model_forward.1} parent=0 // pred_check
    _
  $region11: #{gat_model_forward.1} parent=0 // pred_check_branch
    %20 = sbr.rel (0) target = $region13
  $region12: #{gat_model_forward.1} parent=0 // pred_region
    _
  $region13: #{gat_model_forward.1} parent=0 // pred_fallthru
    _
  // Predicated region
  $region14: #{gat_model_forward.1} parent=0 // pred_check
    _
  $region15: #{gat_model_forward.1} parent=0 // pred_check_branch
    %22 = sbr.rel (0) target = $region17
  $region16: #{gat_model_forward.1} parent=0 // pred_region
    _
  $region17: #{gat_model_forward.1} parent=0 // pred_fallthru
    _
  // Predicated region
  $region18: #{gat_model_forward.1} parent=0 // pred_check
    _
  $region19: #{gat_model_forward.1} parent=0 // pred_check_branch
    %24 = sbr.rel (0) target = $region21
  $region20: #{gat_model_forward.1} parent=0 // pred_region
    _
  $region21: #{gat_model_forward.1} parent=0 // pred_fallthru
    _
  // Predicated region
  $region22: #{gat_model_forward.1} parent=0 // pred_check
    _
  $region23: #{gat_model_forward.1} parent=0 // pred_check_branch
    %26 = sbr.rel (0) target = $region25
  $region24: #{gat_model_forward.1} parent=0 // pred_region
    _
  $region25: #{gat_model_forward.1} parent=0 // pred_fallthru
    _
  // Predicated region
  $region26: #{gat_model_forward.1} parent=0 // pred_check
    _
  $region27: #{gat_model_forward.1} parent=0 // pred_check_branch
    %28 = sbr.rel (0) target = $region29
  $region28: #{gat_model_forward.1} parent=0 // pred_region
    _
  $region29: #{gat_model_forward.1} parent=0 // pred_fallthru
    _
  // Predicated region
  $region30: #{gat_model_forward.1} parent=0 // pred_check
    _
  $region31: #{gat_model_forward.1} parent=0 // pred_check_branch
    %30 = sbr.rel (0) target = $region33
  $region32: #{gat_model_forward.1} parent=0 // pred_region
    _
  $region33: #{gat_model_forward.1} parent=0 // pred_fallthru
    _
  // Predicated region
  $region34: #{gat_model_forward.1} parent=0 // pred_check
    _
  $region35: #{gat_model_forward.1} parent=0 // pred_check_branch
    %32 = sbr.rel (0) target = $region37
  $region36: #{gat_model_forward.1} parent=0 // pred_region
    _
  $region37: #{gat_model_forward.1} parent=0 // pred_fallthru
    _
  // Predicated region
  $region38: #{gat_model_forward.1} parent=0 // pred_check
    _
  $region39: #{gat_model_forward.1} parent=0 // pred_check_branch
    %34 = sbr.rel (0) target = $region41
  $region40: #{gat_model_forward.1} parent=0 // pred_region
    _
  $region41: #{gat_model_forward.1} parent=0 // pred_fallthru
    _
  %v35 = vld [vmem:[%s1] sm:$0xff]
  %vm36 = vcmp.gt.f32.partialorder %v35, 0.0
  %v37 = vsel %vm36, 1, 0
  %v38 = vcvt.s32.f32 %v37
  %v39 = vld [vmem:[%s0] sm:$0xff]
  %v40 = vld [vmem:[%s0 + $0x8] sm:$0xff]
  %v41 = vld [vmem:[%s2] sm:$0xf]
  %v42 = vld [vmem:[%s3] sm:$0x1]
  %v43 = vld [vmem:[%s4] sm:$0xff]
  %v44 = vld [vmem:[%s4 + $0x8] sm:$0xff]
  %v45 = vld [vmem:[%s5] sm:$0x1]
  %v47 = vlaneseq
  %v48 = vshrl.u32 %v47, 7
  %v49 = vsub.s32 0, %v48
  %v50 = vrot.slane %v42, %v49
  %vm52 = vcmask 31744
  %v54 = vsel %vm52, %v39, 0
  %v57 = vsel %vm52, %v40, 0
  %vm59 = vcmask 1043456
  %v61 = vsel %vm59, %v41, 0
  %63 = vmatprep.subr.mxu0 0.0
  %64 = vmatpush1.msra.mxu0 %v61
  %65 = vmatprep.subr.mxu0 0.0
  %66 = vmatpush1.msra.mxu0 0.0
  %67 = vmatprep.subr.mxu0 0.0
  %68 = vmatpush1.msra.mxu0 0.0
  %69 = vmatprep.subr.mxu0 0.0
  %70 = vmatpush1.msra.mxu0 0.0
  %71 = vmatprep.subr.mxu0 0.0
  %72 = vmatpush1.msra.mxu0 0.0
  %73 = vmatprep.subr.mxu0 0.0
  %74 = vmatpush1.msra.mxu0 0.0
  %75 = vmatprep.subr.mxu0 0.0
  %76 = vmatpush1.msra.mxu0 0.0
  %77 = vmatprep.subr.mxu0 0.0
  %78 = vmatpush1.msra.mxu0 0.0
  %79 = vmatprep.subr.mxu0 0.0
  %80 = vmatpush1.msra.mxu0 0.0
  %81 = vmatprep.subr.mxu0 0.0
  %82 = vmatpush1.msra.mxu0 0.0
  %83 = vmatprep.subr.mxu0 0.0
  %84 = vmatpush1.msra.mxu0 0.0
  %85 = vmatprep.subr.mxu0 0.0
  %86 = vmatpush1.msra.mxu0 0.0
  %87 = vmatprep.subr.mxu0 0.0
  %88 = vmatpush1.msra.mxu0 0.0
  %89 = vmatprep.subr.mxu0 0.0
  %90 = vmatpush1.msra.mxu0 0.0
  %91 = vmatprep.subr.mxu0 0.0
  %92 = vmatpush1.msra.mxu0 0.0
  %93 = vmatprep.subr.mxu0 0.0
  %94 = vmatpush1.msra.mxu0 0.0
  %95 = vmatprep.subr.mxu0 0.0
  %96 = vmatpush1.msra.mxu0 0.0
  %97 = vmatprep.subr.mxu0 0.0
  %98 = vmatpush1.msra.mxu0 0.0
  %99 = vmatprep.subr.mxu0 0.0
  %100 = vmatpush1.msra.mxu0 0.0
  %101 = vmatprep.subr.mxu0 0.0
  %102 = vmatpush1.msra.mxu0 0.0
  %103 = vmatprep.subr.mxu0 0.0
  %104 = vmatpush1.msra.mxu0 0.0
  %105 = vmatprep.subr.mxu0 0.0
  %106 = vmatpush1.msra.mxu0 0.0
  %107 = vmatprep.subr.mxu0 0.0
  %108 = vmatpush1.msra.mxu0 0.0
  %109 = vmatprep.subr.mxu0 0.0
  %110 = vmatpush1.msra.mxu0 0.0
  %111 = vmatprep.subr.mxu0 0.0
  %112 = vmatpush1.msra.mxu0 0.0
  %113 = vmatprep.subr.mxu0 0.0
  %114 = vmatpush1.msra.mxu0 0.0
  %115 = vmatprep.subr.mxu0 0.0
  %116 = vmatpush1.msra.mxu0 0.0
  %117 = vmatprep.subr.mxu0 0.0
  %118 = vmatpush1.msra.mxu0 0.0
  %119 = vmatprep.subr.mxu0 0.0
  %120 = vmatpush1.msra.mxu0 0.0
  %121 = vmatprep.subr.mxu0 0.0
  %122 = vmatpush1.msra.mxu0 0.0
  %123 = vmatprep.subr.mxu0 0.0
  %124 = vmatpush1.msra.mxu0 0.0
  %125 = vmatprep.subr.mxu0 0.0
  %126 = vmatpush1.msra.mxu0 0.0
  %127 = vmatprep.mubr.f32.mxu0 0.0
  %128 = vmatmul.mubr.f32.gmra.mrb[0].mxu0 %v54
  %v129 = vpop.f32.mrb[0].mxu0
  %v130 = vadd.f32 %v50, %v129
  %v131 = vpop.f32.mrb[0].mxu0
  %132 = vmatprep.mubr.f32.mxu0 0.0
  %133 = vmatmul.mubr.f32.gmra.mrb[0].mxu0 %v57
  %v134 = vpop.f32.mrb[0].mxu0
  %v135 = vadd.f32 %v50, %v134
  %v136 = vpop.f32.mrb[0].mxu0
  %137 = vdwg.mxu0
  %v139 = vlaneseq
  %v140 = vshrl.u32 %v139, 7
  %v141 = vsub.s32 0, %v140
  %v142 = vrot.slane %v45, %v141
  %vm144 = vcmask 130048
  %v146 = vsel %vm144, %v130, 0
  %v149 = vsel %vm144, %v135, 0
  %151 = vmatprep.subr.mxu0 0.0
  %152 = vmatpush1.msra.mxu0 %v43
  %153 = vmatprep.subr.mxu0 0.0
  %154 = vmatpush1.msra.mxu0 %v44
  %155 = vmatprep.subr.mxu0 0.0
  %156 = vmatpush1.msra.mxu0 0.0
  %157 = vmatprep.subr.mxu0 0.0
  %158 = vmatpush1.msra.mxu0 0.0
  %159 = vmatprep.subr.mxu0 0.0
  %160 = vmatpush1.msra.mxu0 0.0
  %161 = vmatprep.subr.mxu0 0.0
  %162 = vmatpush1.msra.mxu0 0.0
  %163 = vmatprep.subr.mxu0 0.0
  %164 = vmatpush1.msra.mxu0 0.0
  %165 = vmatprep.subr.mxu0 0.0
  %166 = vmatpush1.msra.mxu0 0.0
  %167 = vmatprep.subr.mxu0 0.0
  %168 = vmatpush1.msra.mxu0 0.0
  %169 = vmatprep.subr.mxu0 0.0
  %170 = vmatpush1.msra.mxu0 0.0
  %171 = vmatprep.subr.mxu0 0.0
  %172 = vmatpush1.msra.mxu0 0.0
  %173 = vmatprep.subr.mxu0 0.0
  %174 = vmatpush1.msra.mxu0 0.0
  %175 = vmatprep.subr.mxu0 0.0
  %176 = vmatpush1.msra.mxu0 0.0
  %177 = vmatprep.subr.mxu0 0.0
  %178 = vmatpush1.msra.mxu0 0.0
  %179 = vmatprep.subr.mxu0 0.0
  %180 = vmatpush1.msra.mxu0 0.0
  %181 = vmatprep.subr.mxu0 0.0
  %182 = vmatpush1.msra.mxu0 0.0
  %183 = vmatprep.subr.mxu0 0.0
  %184 = vmatpush1.msra.mxu0 0.0
  %185 = vmatprep.subr.mxu0 0.0
  %186 = vmatpush1.msra.mxu0 0.0
  %187 = vmatprep.subr.mxu0 0.0
  %188 = vmatpush1.msra.mxu0 0.0
  %189 = vmatprep.subr.mxu0 0.0
  %190 = vmatpush1.msra.mxu0 0.0
  %191 = vmatprep.subr.mxu0 0.0
  %192 = vmatpush1.msra.mxu0 0.0
  %193 = vmatprep.subr.mxu0 0.0
  %194 = vmatpush1.msra.mxu0 0.0
  %195 = vmatprep.subr.mxu0 0.0
  %196 = vmatpush1.msra.mxu0 0.0
  %197 = vmatprep.subr.mxu0 0.0
  %198 = vmatpush1.msra.mxu0 0.0
  %199 = vmatprep.subr.mxu0 0.0
  %200 = vmatpush1.msra.mxu0 0.0
  %201 = vmatprep.subr.mxu0 0.0
  %202 = vmatpush1.msra.mxu0 0.0
  %203 = vmatprep.subr.mxu0 0.0
  %204 = vmatpush1.msra.mxu0 0.0
  %205 = vmatprep.subr.mxu0 0.0
  %206 = vmatpush1.msra.mxu0 0.0
  %207 = vmatprep.subr.mxu0 0.0
  %208 = vmatpush1.msra.mxu0 0.0
  %209 = vmatprep.subr.mxu0 0.0
  %210 = vmatpush1.msra.mxu0 0.0
  %211 = vmatprep.subr.mxu0 0.0
  %212 = vmatpush1.msra.mxu0 0.0
  %213 = vmatprep.subr.mxu0 0.0
  %214 = vmatpush1.msra.mxu0 0.0
  %215 = vmatprep.mubr.f32.mxu0 0.0
  %216 = vmatmul.mubr.f32.gmra.mrb[0].mxu0 %v146
  %v217 = vpop.f32.mrb[0].mxu0
  %v218 = vadd.f32 %v142, %v217
  %v219 = vpop.f32.mrb[0].mxu0
  %220 = vmatprep.mubr.f32.mxu0 0.0
  %221 = vmatmul.mubr.f32.gmra.mrb[0].mxu0 %v149
  %v222 = vpop.f32.mrb[0].mxu0
  %v223 = vadd.f32 %v142, %v222
  %v224 = vpop.f32.mrb[0].mxu0
  %225 = vdwg.mxu0
  %228 = vrot.lane.b32.xlu0 %v218, 126
  %v229 = vpop.permute.xlu0 %228
  %230 = vrot.lane.b32.xlu0 %v223, 126
  %v231 = vpop.permute.xlu0 %230
  %234 = vxpose.xlu0.b32.start [1/16] %v229, 128
  %235 = vxpose.xlu0.b32.cont [2/16] %v231, 128
  %236 = vxpose.xlu0.b32.cont [3/16] 0.0, 128
  %237 = vxpose.xlu0.b32.cont [4/16] 0.0, 128
  %238 = vxpose.xlu0.b32.cont [5/16] 0.0, 128
  %239 = vxpose.xlu0.b32.cont [6/16] 0.0, 128
  %240 = vxpose.xlu0.b32.cont [7/16] 0.0, 128
  %241 = vxpose.xlu0.b32.cont [8/16] 0.0, 128
  %242 = vxpose.xlu0.b32.cont [9/16] 0.0, 128
  %243 = vxpose.xlu0.b32.cont [10/16] 0.0, 128
  %244 = vxpose.xlu0.b32.cont [11/16] 0.0, 128
  %245 = vxpose.xlu0.b32.cont [12/16] 0.0, 128
  %246 = vxpose.xlu0.b32.cont [13/16] 0.0, 128
  %247 = vxpose.xlu0.b32.cont [14/16] 0.0, 128
  %248 = vxpose.xlu0.b32.cont [15/16] 0.0, 128
  %249 = vxpose.xlu0.b32.end [16/16] 0.0, 128
  %v250 = vpop.trf.xlu0
  %v251 = vpop.trf.xlu0
  %v252 = vpop.trf.xlu0
  %v253 = vpop.trf.xlu0
  %v254 = vpop.trf.xlu0
  %v255 = vpop.trf.xlu0
  %v256 = vpop.trf.xlu0
  %v257 = vpop.trf.xlu0
  %v258 = vpop.trf.xlu0
  %v259 = vpop.trf.xlu0
  %v260 = vpop.trf.xlu0
  %v261 = vpop.trf.xlu0
  %v262 = vpop.trf.xlu0
  %v263 = vpop.trf.xlu0
  %v264 = vpop.trf.xlu0
  %v265 = vpop.trf.xlu0
  %266 = vset.pattern.permute.xlu0 0
  %267 = vperm.xlu0 %266, %v218
  %v268 = vpop.permute.xlu0 %267
  %v270 = vlaneseq
  %v271 = vshrl.u32 %v270, 7
  %v272 = vsub.s32 0, %v271
  %v273 = vrot.slane %v250, %v272
  %v274 = vadd.f32 %v268, %v273
  %vm275 = vcmp.ge.f32.partialorder %v274, 0.0
  %v276 = vmul.f32 %v274, 0.2
  %v277 = vsel %vm275, %v274, %v276
  %v278 = vsel %vm36, %v277, -1e+30
  %vm279 = vcmask 64512
  %v280 = vsel %vm279, %v278, -inf
  %281 = vmax.xlane.f32.xlu0 %v280
  %v282 = vpop.xlane.xlu0 %281
  %v283 = vsub.f32 %v278, %v282
  %v284 = vmul.f32 %v283, 1.442695
  %v285 = vpow.pop %v284
  %v286 = vmul.f32 %v285, %v38
  %v287 = vsel %vm279, %v286, 0.0
  %288 = vadd.xlane.f32.xlu0 %v287
  %v289 = vpop.xlane.xlu0 %288
  %v290 = vmax.f32 %v289, 1e-30
  %v291 = vrcp.pop %v290
  %v292 = vmul.f32 %v286, %v291
  %v294 = vsel %vm279, %v292, 0
  %296 = vmatprep.subr.mxu0 0.0
  %297 = vmatpush1.msra.mxu0 %v130
  %298 = vmatprep.subr.mxu0 0.0
  %299 = vmatpush1.msra.mxu0 0.0
  %300 = vmatprep.subr.mxu0 0.0
  %301 = vmatpush1.msra.mxu0 0.0
  %302 = vmatprep.subr.mxu0 0.0
  %303 = vmatpush1.msra.mxu0 0.0
  %304 = vmatprep.subr.mxu0 0.0
  %305 = vmatpush1.msra.mxu0 0.0
  %306 = vmatprep.subr.mxu0 0.0
  %307 = vmatpush1.msra.mxu0 0.0
  %308 = vmatprep.subr.mxu0 0.0
  %309 = vmatpush1.msra.mxu0 0.0
  %310 = vmatprep.subr.mxu0 0.0
  %311 = vmatpush1.msra.mxu0 0.0
  %312 = vmatprep.subr.mxu0 0.0
  %313 = vmatpush1.msra.mxu0 0.0
  %314 = vmatprep.subr.mxu0 0.0
  %315 = vmatpush1.msra.mxu0 0.0
  %316 = vmatprep.subr.mxu0 0.0
  %317 = vmatpush1.msra.mxu0 0.0
  %318 = vmatprep.subr.mxu0 0.0
  %319 = vmatpush1.msra.mxu0 0.0
  %320 = vmatprep.subr.mxu0 0.0
  %321 = vmatpush1.msra.mxu0 0.0
  %322 = vmatprep.subr.mxu0 0.0
  %323 = vmatpush1.msra.mxu0 0.0
  %324 = vmatprep.subr.mxu0 0.0
  %325 = vmatpush1.msra.mxu0 0.0
  %326 = vmatprep.subr.mxu0 0.0
  %327 = vmatpush1.msra.mxu0 0.0
  %328 = vmatprep.subr.mxu0 0.0
  %329 = vmatpush1.msra.mxu0 0.0
  %330 = vmatprep.subr.mxu0 0.0
  %331 = vmatpush1.msra.mxu0 0.0
  %332 = vmatprep.subr.mxu0 0.0
  %333 = vmatpush1.msra.mxu0 0.0
  %334 = vmatprep.subr.mxu0 0.0
  %335 = vmatpush1.msra.mxu0 0.0
  %336 = vmatprep.subr.mxu0 0.0
  %337 = vmatpush1.msra.mxu0 0.0
  %338 = vmatprep.subr.mxu0 0.0
  %339 = vmatpush1.msra.mxu0 0.0
  %340 = vmatprep.subr.mxu0 0.0
  %341 = vmatpush1.msra.mxu0 0.0
  %342 = vmatprep.subr.mxu0 0.0
  %343 = vmatpush1.msra.mxu0 0.0
  %344 = vmatprep.subr.mxu0 0.0
  %345 = vmatpush1.msra.mxu0 0.0
  %346 = vmatprep.subr.mxu0 0.0
  %347 = vmatpush1.msra.mxu0 0.0
  %348 = vmatprep.subr.mxu0 0.0
  %349 = vmatpush1.msra.mxu0 0.0
  %350 = vmatprep.subr.mxu0 0.0
  %351 = vmatpush1.msra.mxu0 0.0
  %352 = vmatprep.subr.mxu0 0.0
  %353 = vmatpush1.msra.mxu0 0.0
  %354 = vmatprep.subr.mxu0 0.0
  %355 = vmatpush1.msra.mxu0 0.0
  %356 = vmatprep.subr.mxu0 0.0
  %357 = vmatpush1.msra.mxu0 0.0
  %358 = vmatprep.subr.mxu0 0.0
  %359 = vmatpush1.msra.mxu0 0.0
  %360 = vmatprep.mubr.f32.mxu0 0.0
  %361 = vmatmul.mubr.f32.gmra.mrb[0].mxu0 %v294
  %v362 = vpop.f32.mrb[0].mxu0
  %v363 = vadd.f32 0.0, %v362
  %v364 = vpop.f32.mrb[0].mxu0
  %365 = vdwg.mxu0
  %366 = vset.pattern.permute.xlu0 1
  %367 = vperm.xlu0 %366, %v218
  %v368 = vpop.permute.xlu0 %367
  %v370 = vlaneseq
  %v371 = vshrl.u32 %v370, 7
  %v372 = vsub.s32 1, %v371
  %v373 = vrot.slane %v250, %v372
  %v374 = vadd.f32 %v368, %v373
  %vm375 = vcmp.ge.f32.partialorder %v374, 0.0
  %v376 = vmul.f32 %v374, 0.2
  %v377 = vsel %vm375, %v374, %v376
  %v378 = vsel %vm36, %v377, -1e+30
  %v379 = vsel %vm279, %v378, -inf
  %380 = vmax.xlane.f32.xlu0 %v379
  %v381 = vpop.xlane.xlu0 %380
  %v382 = vsub.f32 %v378, %v381
  %v383 = vmul.f32 %v382, 1.442695
  %v384 = vpow.pop %v383
  %v385 = vmul.f32 %v384, %v38
  %v386 = vsel %vm279, %v385, 0.0
  %387 = vadd.xlane.f32.xlu0 %v386
  %v388 = vpop.xlane.xlu0 %387
  %v389 = vmax.f32 %v388, 1e-30
  %v390 = vrcp.pop %v389
  %v391 = vmul.f32 %v385, %v390
  %392 = vrot.lane.b32.xlu0 %v130, 120
  %v393 = vpop.permute.xlu0 %392
  %v396 = vsel %vm279, %v391, 0
  %398 = vmatprep.subr.mxu0 0.0
  %399 = vmatpush1.msra.mxu0 %v393
  %400 = vmatprep.subr.mxu0 0.0
  %401 = vmatpush1.msra.mxu0 0.0
  %402 = vmatprep.subr.mxu0 0.0
  %403 = vmatpush1.msra.mxu0 0.0
  %404 = vmatprep.subr.mxu0 0.0
  %405 = vmatpush1.msra.mxu0 0.0
  %406 = vmatprep.subr.mxu0 0.0
  %407 = vmatpush1.msra.mxu0 0.0
  %408 = vmatprep.subr.mxu0 0.0
  %409 = vmatpush1.msra.mxu0 0.0
  %410 = vmatprep.subr.mxu0 0.0
  %411 = vmatpush1.msra.mxu0 0.0
  %412 = vmatprep.subr.mxu0 0.0
  %413 = vmatpush1.msra.mxu0 0.0
  %414 = vmatprep.subr.mxu0 0.0
  %415 = vmatpush1.msra.mxu0 0.0
  %416 = vmatprep.subr.mxu0 0.0
  %417 = vmatpush1.msra.mxu0 0.0
  %418 = vmatprep.subr.mxu0 0.0
  %419 = vmatpush1.msra.mxu0 0.0
  %420 = vmatprep.subr.mxu0 0.0
  %421 = vmatpush1.msra.mxu0 0.0
  %422 = vmatprep.subr.mxu0 0.0
  %423 = vmatpush1.msra.mxu0 0.0
  %424 = vmatprep.subr.mxu0 0.0
  %425 = vmatpush1.msra.mxu0 0.0
  %426 = vmatprep.subr.mxu0 0.0
  %427 = vmatpush1.msra.mxu0 0.0
  %428 = vmatprep.subr.mxu0 0.0
  %429 = vmatpush1.msra.mxu0 0.0
  %430 = vmatprep.subr.mxu0 0.0
  %431 = vmatpush1.msra.mxu0 0.0
  %432 = vmatprep.subr.mxu0 0.0
  %433 = vmatpush1.msra.mxu0 0.0
  %434 = vmatprep.subr.mxu0 0.0
  %435 = vmatpush1.msra.mxu0 0.0
  %436 = vmatprep.subr.mxu0 0.0
  %437 = vmatpush1.msra.mxu0 0.0
  %438 = vmatprep.subr.mxu0 0.0
  %439 = vmatpush1.msra.mxu0 0.0
  %440 = vmatprep.subr.mxu0 0.0
  %441 = vmatpush1.msra.mxu0 0.0
  %442 = vmatprep.subr.mxu0 0.0
  %443 = vmatpush1.msra.mxu0 0.0
  %444 = vmatprep.subr.mxu0 0.0
  %445 = vmatpush1.msra.mxu0 0.0
  %446 = vmatprep.subr.mxu0 0.0
  %447 = vmatpush1.msra.mxu0 0.0
  %448 = vmatprep.subr.mxu0 0.0
  %449 = vmatpush1.msra.mxu0 0.0
  %450 = vmatprep.subr.mxu0 0.0
  %451 = vmatpush1.msra.mxu0 0.0
  %452 = vmatprep.subr.mxu0 0.0
  %453 = vmatpush1.msra.mxu0 0.0
  %454 = vmatprep.subr.mxu0 0.0
  %455 = vmatpush1.msra.mxu0 0.0
  %456 = vmatprep.subr.mxu0 0.0
  %457 = vmatpush1.msra.mxu0 0.0
  %458 = vmatprep.subr.mxu0 0.0
  %459 = vmatpush1.msra.mxu0 0.0
  %460 = vmatprep.subr.mxu0 0.0
  %461 = vmatpush1.msra.mxu0 0.0
  %462 = vmatprep.mubr.f32.mxu0 0.0
  %463 = vmatmul.mubr.f32.gmra.mrb[0].mxu0 %v396
  %v464 = vpop.f32.mrb[0].mxu0
  %v465 = vadd.f32 0.0, %v464
  %v466 = vpop.f32.mrb[0].mxu0
  %467 = vdwg.mxu0
  %469 = vrot.lane.b32.xlu0 %v465, 8
  %v470 = vpop.permute.xlu0 %469
  %v472 = vsel %vm279, %v363, %v470
  %473 = vset.pattern.permute.xlu0 0
  %474 = vperm.xlu0 %473, %v223
  %v475 = vpop.permute.xlu0 %474
  %v477 = vadd.f32 %v475, %v273
  %vm478 = vcmp.ge.f32.partialorder %v477, 0.0
  %v479 = vmul.f32 %v477, 0.2
  %v480 = vsel %vm478, %v477, %v479
  %482 = vrot.lane.b32.xlu0 %v480, 120
  %v483 = vpop.permute.xlu0 %482
  %v485 = vsel %vm36, %v483, -1e+30
  %v486 = vsel %vm279, %v485, -inf
  %487 = vmax.xlane.f32.xlu0 %v486
  %v488 = vpop.xlane.xlu0 %487
  %v489 = vsub.f32 %v485, %v488
  %v490 = vmul.f32 %v489, 1.442695
  %v491 = vpow.pop %v490
  %v492 = vmul.f32 %v491, %v38
  %v493 = vsel %vm279, %v492, 0.0
  %494 = vadd.xlane.f32.xlu0 %v493
  %v495 = vpop.xlane.xlu0 %494
  %v496 = vmax.f32 %v495, 1e-30
  %v497 = vrcp.pop %v496
  %v498 = vmul.f32 %v492, %v497
  %v500 = vsel %vm279, %v498, 0
  %502 = vmatprep.subr.mxu0 0.0
  %503 = vmatpush1.msra.mxu0 %v135
  %504 = vmatprep.subr.mxu0 0.0
  %505 = vmatpush1.msra.mxu0 0.0
  %506 = vmatprep.subr.mxu0 0.0
  %507 = vmatpush1.msra.mxu0 0.0
  %508 = vmatprep.subr.mxu0 0.0
  %509 = vmatpush1.msra.mxu0 0.0
  %510 = vmatprep.subr.mxu0 0.0
  %511 = vmatpush1.msra.mxu0 0.0
  %512 = vmatprep.subr.mxu0 0.0
  %513 = vmatpush1.msra.mxu0 0.0
  %514 = vmatprep.subr.mxu0 0.0
  %515 = vmatpush1.msra.mxu0 0.0
  %516 = vmatprep.subr.mxu0 0.0
  %517 = vmatpush1.msra.mxu0 0.0
  %518 = vmatprep.subr.mxu0 0.0
  %519 = vmatpush1.msra.mxu0 0.0
  %520 = vmatprep.subr.mxu0 0.0
  %521 = vmatpush1.msra.mxu0 0.0
  %522 = vmatprep.subr.mxu0 0.0
  %523 = vmatpush1.msra.mxu0 0.0
  %524 = vmatprep.subr.mxu0 0.0
  %525 = vmatpush1.msra.mxu0 0.0
  %526 = vmatprep.subr.mxu0 0.0
  %527 = vmatpush1.msra.mxu0 0.0
  %528 = vmatprep.subr.mxu0 0.0
  %529 = vmatpush1.msra.mxu0 0.0
  %530 = vmatprep.subr.mxu0 0.0
  %531 = vmatpush1.msra.mxu0 0.0
  %532 = vmatprep.subr.mxu0 0.0
  %533 = vmatpush1.msra.mxu0 0.0
  %534 = vmatprep.subr.mxu0 0.0
  %535 = vmatpush1.msra.mxu0 0.0
  %536 = vmatprep.subr.mxu0 0.0
  %537 = vmatpush1.msra.mxu0 0.0
  %538 = vmatprep.subr.mxu0 0.0
  %539 = vmatpush1.msra.mxu0 0.0
  %540 = vmatprep.subr.mxu0 0.0
  %541 = vmatpush1.msra.mxu0 0.0
  %542 = vmatprep.subr.mxu0 0.0
  %543 = vmatpush1.msra.mxu0 0.0
  %544 = vmatprep.subr.mxu0 0.0
  %545 = vmatpush1.msra.mxu0 0.0
  %546 = vmatprep.subr.mxu0 0.0
  %547 = vmatpush1.msra.mxu0 0.0
  %548 = vmatprep.subr.mxu0 0.0
  %549 = vmatpush1.msra.mxu0 0.0
  %550 = vmatprep.subr.mxu0 0.0
  %551 = vmatpush1.msra.mxu0 0.0
  %552 = vmatprep.subr.mxu0 0.0
  %553 = vmatpush1.msra.mxu0 0.0
  %554 = vmatprep.subr.mxu0 0.0
  %555 = vmatpush1.msra.mxu0 0.0
  %556 = vmatprep.subr.mxu0 0.0
  %557 = vmatpush1.msra.mxu0 0.0
  %558 = vmatprep.subr.mxu0 0.0
  %559 = vmatpush1.msra.mxu0 0.0
  %560 = vmatprep.subr.mxu0 0.0
  %561 = vmatpush1.msra.mxu0 0.0
  %562 = vmatprep.subr.mxu0 0.0
  %563 = vmatpush1.msra.mxu0 0.0
  %564 = vmatprep.subr.mxu0 0.0
  %565 = vmatpush1.msra.mxu0 0.0
  %566 = vmatprep.mubr.f32.mxu0 0.0
  %567 = vmatmul.mubr.f32.gmra.mrb[0].mxu0 %v500
  %v568 = vpop.f32.mrb[0].mxu0
  %v569 = vadd.f32 0.0, %v568
  %v570 = vpop.f32.mrb[0].mxu0
  %571 = vdwg.mxu0
  %572 = vset.pattern.permute.xlu0 1
  %573 = vperm.xlu0 %572, %v223
  %v574 = vpop.permute.xlu0 %573
  %v576 = vadd.f32 %v574, %v373
  %vm577 = vcmp.ge.f32.partialorder %v576, 0.0
  %v578 = vmul.f32 %v576, 0.2
  %v579 = vsel %vm577, %v576, %v578
  %581 = vrot.lane.b32.xlu0 %v579, 120
  %v582 = vpop.permute.xlu0 %581
  %v584 = vsel %vm36, %v582, -1e+30
  %v585 = vsel %vm279, %v584, -inf
  %586 = vmax.xlane.f32.xlu0 %v585
  %v587 = vpop.xlane.xlu0 %586
  %v588 = vsub.f32 %v584, %v587
  %v589 = vmul.f32 %v588, 1.442695
  %v590 = vpow.pop %v589
  %v591 = vmul.f32 %v590, %v38
  %v592 = vsel %vm279, %v591, 0.0
  %593 = vadd.xlane.f32.xlu0 %v592
  %v594 = vpop.xlane.xlu0 %593
  %v595 = vmax.f32 %v594, 1e-30
  %v596 = vrcp.pop %v595
  %v597 = vmul.f32 %v591, %v596
  %598 = vrot.lane.b32.xlu0 %v135, 120
  %v599 = vpop.permute.xlu0 %598
  %v602 = vsel %vm279, %v597, 0
  %604 = vmatprep.subr.mxu0 0.0
  %605 = vmatpush1.msra.mxu0 %v599
  %606 = vmatprep.subr.mxu0 0.0
  %607 = vmatpush1.msra.mxu0 0.0
  %608 = vmatprep.subr.mxu0 0.0
  %609 = vmatpush1.msra.mxu0 0.0
  %610 = vmatprep.subr.mxu0 0.0
  %611 = vmatpush1.msra.mxu0 0.0
  %612 = vmatprep.subr.mxu0 0.0
  %613 = vmatpush1.msra.mxu0 0.0
  %614 = vmatprep.subr.mxu0 0.0
  %615 = vmatpush1.msra.mxu0 0.0
  %616 = vmatprep.subr.mxu0 0.0
  %617 = vmatpush1.msra.mxu0 0.0
  %618 = vmatprep.subr.mxu0 0.0
  %619 = vmatpush1.msra.mxu0 0.0
  %620 = vmatprep.subr.mxu0 0.0
  %621 = vmatpush1.msra.mxu0 0.0
  %622 = vmatprep.subr.mxu0 0.0
  %623 = vmatpush1.msra.mxu0 0.0
  %624 = vmatprep.subr.mxu0 0.0
  %625 = vmatpush1.msra.mxu0 0.0
  %626 = vmatprep.subr.mxu0 0.0
  %627 = vmatpush1.msra.mxu0 0.0
  %628 = vmatprep.subr.mxu0 0.0
  %629 = vmatpush1.msra.mxu0 0.0
  %630 = vmatprep.subr.mxu0 0.0
  %631 = vmatpush1.msra.mxu0 0.0
  %632 = vmatprep.subr.mxu0 0.0
  %633 = vmatpush1.msra.mxu0 0.0
  %634 = vmatprep.subr.mxu0 0.0
  %635 = vmatpush1.msra.mxu0 0.0
  %636 = vmatprep.subr.mxu0 0.0
  %637 = vmatpush1.msra.mxu0 0.0
  %638 = vmatprep.subr.mxu0 0.0
  %639 = vmatpush1.msra.mxu0 0.0
  %640 = vmatprep.subr.mxu0 0.0
  %641 = vmatpush1.msra.mxu0 0.0
  %642 = vmatprep.subr.mxu0 0.0
  %643 = vmatpush1.msra.mxu0 0.0
  %644 = vmatprep.subr.mxu0 0.0
  %645 = vmatpush1.msra.mxu0 0.0
  %646 = vmatprep.subr.mxu0 0.0
  %647 = vmatpush1.msra.mxu0 0.0
  %648 = vmatprep.subr.mxu0 0.0
  %649 = vmatpush1.msra.mxu0 0.0
  %650 = vmatprep.subr.mxu0 0.0
  %651 = vmatpush1.msra.mxu0 0.0
  %652 = vmatprep.subr.mxu0 0.0
  %653 = vmatpush1.msra.mxu0 0.0
  %654 = vmatprep.subr.mxu0 0.0
  %655 = vmatpush1.msra.mxu0 0.0
  %656 = vmatprep.subr.mxu0 0.0
  %657 = vmatpush1.msra.mxu0 0.0
  %658 = vmatprep.subr.mxu0 0.0
  %659 = vmatpush1.msra.mxu0 0.0
  %660 = vmatprep.subr.mxu0 0.0
  %661 = vmatpush1.msra.mxu0 0.0
  %662 = vmatprep.subr.mxu0 0.0
  %663 = vmatpush1.msra.mxu0 0.0
  %664 = vmatprep.subr.mxu0 0.0
  %665 = vmatpush1.msra.mxu0 0.0
  %666 = vmatprep.subr.mxu0 0.0
  %667 = vmatpush1.msra.mxu0 0.0
  %668 = vmatprep.mubr.f32.mxu0 0.0
  %669 = vmatmul.mubr.f32.gmra.mrb[0].mxu0 %v602
  %v670 = vpop.f32.mrb[0].mxu0
  %v671 = vadd.f32 0.0, %v670
  %v672 = vpop.f32.mrb[0].mxu0
  %673 = vdwg.mxu0
  %675 = vrot.lane.b32.xlu0 %v671, 8
  %v676 = vpop.permute.xlu0 %675
  %v678 = vsel %vm279, %v569, %v676
  %v679 = vld [vmem:[%s6] sm:$0xff]
  %v680 = vld [vmem:[%s6 + $0x8] sm:$0xff]
  %v681 = vld [vmem:[%s7] sm:$0x1]
  %v682 = vld [vmem:[%s8] sm:$0x3f]
  %v683 = vld [vmem:[%s9] sm:$0x1]
  %v685 = vlaneseq
  %v686 = vshrl.u32 %v685, 7
  %v687 = vsub.s32 0, %v686
  %v688 = vrot.slane %v681, %v687
  %v691 = vsel %vm144, %v472, 0
  %v694 = vsel %vm144, %v678, 0
  %696 = vmatprep.subr.mxu0 0.0
  %697 = vmatpush1.msra.mxu0 %v679
  %698 = vmatprep.subr.mxu0 0.0
  %699 = vmatpush1.msra.mxu0 %v680
  %700 = vmatprep.subr.mxu0 0.0
  %701 = vmatpush1.msra.mxu0 0.0
  %702 = vmatprep.subr.mxu0 0.0
  %703 = vmatpush1.msra.mxu0 0.0
  %704 = vmatprep.subr.mxu0 0.0
  %705 = vmatpush1.msra.mxu0 0.0
  %706 = vmatprep.subr.mxu0 0.0
  %707 = vmatpush1.msra.mxu0 0.0
  %708 = vmatprep.subr.mxu0 0.0
  %709 = vmatpush1.msra.mxu0 0.0
  %710 = vmatprep.subr.mxu0 0.0
  %711 = vmatpush1.msra.mxu0 0.0
  %712 = vmatprep.subr.mxu0 0.0
  %713 = vmatpush1.msra.mxu0 0.0
  %714 = vmatprep.subr.mxu0 0.0
  %715 = vmatpush1.msra.mxu0 0.0
  %716 = vmatprep.subr.mxu0 0.0
  %717 = vmatpush1.msra.mxu0 0.0
  %718 = vmatprep.subr.mxu0 0.0
  %719 = vmatpush1.msra.mxu0 0.0
  %720 = vmatprep.subr.mxu0 0.0
  %721 = vmatpush1.msra.mxu0 0.0
  %722 = vmatprep.subr.mxu0 0.0
  %723 = vmatpush1.msra.mxu0 0.0
  %724 = vmatprep.subr.mxu0 0.0
  %725 = vmatpush1.msra.mxu0 0.0
  %726 = vmatprep.subr.mxu0 0.0
  %727 = vmatpush1.msra.mxu0 0.0
  %728 = vmatprep.subr.mxu0 0.0
  %729 = vmatpush1.msra.mxu0 0.0
  %730 = vmatprep.subr.mxu0 0.0
  %731 = vmatpush1.msra.mxu0 0.0
  %732 = vmatprep.subr.mxu0 0.0
  %733 = vmatpush1.msra.mxu0 0.0
  %734 = vmatprep.subr.mxu0 0.0
  %735 = vmatpush1.msra.mxu0 0.0
  %736 = vmatprep.subr.mxu0 0.0
  %737 = vmatpush1.msra.mxu0 0.0
  %738 = vmatprep.subr.mxu0 0.0
  %739 = vmatpush1.msra.mxu0 0.0
  %740 = vmatprep.subr.mxu0 0.0
  %741 = vmatpush1.msra.mxu0 0.0
  %742 = vmatprep.subr.mxu0 0.0
  %743 = vmatpush1.msra.mxu0 0.0
  %744 = vmatprep.subr.mxu0 0.0
  %745 = vmatpush1.msra.mxu0 0.0
  %746 = vmatprep.subr.mxu0 0.0
  %747 = vmatpush1.msra.mxu0 0.0
  %748 = vmatprep.subr.mxu0 0.0
  %749 = vmatpush1.msra.mxu0 0.0
  %750 = vmatprep.subr.mxu0 0.0
  %751 = vmatpush1.msra.mxu0 0.0
  %752 = vmatprep.subr.mxu0 0.0
  %753 = vmatpush1.msra.mxu0 0.0
  %754 = vmatprep.subr.mxu0 0.0
  %755 = vmatpush1.msra.mxu0 0.0
  %756 = vmatprep.subr.mxu0 0.0
  %757 = vmatpush1.msra.mxu0 0.0
  %758 = vmatprep.subr.mxu0 0.0
  %759 = vmatpush1.msra.mxu0 0.0
  %760 = vmatprep.mubr.f32.mxu0 0.0
  %761 = vmatmul.mubr.f32.gmra.mrb[0].mxu0 %v691
  %v762 = vpop.f32.mrb[0].mxu0
  %v763 = vadd.f32 %v688, %v762
  %v764 = vpop.f32.mrb[0].mxu0
  %765 = vmatprep.mubr.f32.mxu0 0.0
  %766 = vmatmul.mubr.f32.gmra.mrb[0].mxu0 %v694
  %v767 = vpop.f32.mrb[0].mxu0
  %v768 = vadd.f32 %v688, %v767
  %v769 = vpop.f32.mrb[0].mxu0
  %770 = vdwg.mxu0
  %v772 = vlaneseq
  %v773 = vshrl.u32 %v772, 7
  %v774 = vsub.s32 0, %v773
  %v775 = vrot.slane %v683, %v774
  %vm777 = vcmask 48128
  %v779 = vsel %vm777, %v763, 0
  %v782 = vsel %vm777, %v768, 0
  %vm784 = vcmask 1045504
  %v786 = vsel %vm784, %v682, 0
  %788 = vmatprep.subr.mxu0 0.0
  %789 = vmatpush1.msra.mxu0 %v786
  %790 = vmatprep.subr.mxu0 0.0
  %791 = vmatpush1.msra.mxu0 0.0
  %792 = vmatprep.subr.mxu0 0.0
  %793 = vmatpush1.msra.mxu0 0.0
  %794 = vmatprep.subr.mxu0 0.0
  %795 = vmatpush1.msra.mxu0 0.0
  %796 = vmatprep.subr.mxu0 0.0
  %797 = vmatpush1.msra.mxu0 0.0
  %798 = vmatprep.subr.mxu0 0.0
  %799 = vmatpush1.msra.mxu0 0.0
  %800 = vmatprep.subr.mxu0 0.0
  %801 = vmatpush1.msra.mxu0 0.0
  %802 = vmatprep.subr.mxu0 0.0
  %803 = vmatpush1.msra.mxu0 0.0
  %804 = vmatprep.subr.mxu0 0.0
  %805 = vmatpush1.msra.mxu0 0.0
  %806 = vmatprep.subr.mxu0 0.0
  %807 = vmatpush1.msra.mxu0 0.0
  %808 = vmatprep.subr.mxu0 0.0
  %809 = vmatpush1.msra.mxu0 0.0
  %810 = vmatprep.subr.mxu0 0.0
  %811 = vmatpush1.msra.mxu0 0.0
  %812 = vmatprep.subr.mxu0 0.0
  %813 = vmatpush1.msra.mxu0 0.0
  %814 = vmatprep.subr.mxu0 0.0
  %815 = vmatpush1.msra.mxu0 0.0
  %816 = vmatprep.subr.mxu0 0.0
  %817 = vmatpush1.msra.mxu0 0.0
  %818 = vmatprep.subr.mxu0 0.0
  %819 = vmatpush1.msra.mxu0 0.0
  %820 = vmatprep.subr.mxu0 0.0
  %821 = vmatpush1.msra.mxu0 0.0
  %822 = vmatprep.subr.mxu0 0.0
  %823 = vmatpush1.msra.mxu0 0.0
  %824 = vmatprep.subr.mxu0 0.0
  %825 = vmatpush1.msra.mxu0 0.0
  %826 = vmatprep.subr.mxu0 0.0
  %827 = vmatpush1.msra.mxu0 0.0
  %828 = vmatprep.subr.mxu0 0.0
  %829 = vmatpush1.msra.mxu0 0.0
  %830 = vmatprep.subr.mxu0 0.0
  %831 = vmatpush1.msra.mxu0 0.0
  %832 = vmatprep.subr.mxu0 0.0
  %833 = vmatpush1.msra.mxu0 0.0
  %834 = vmatprep.subr.mxu0 0.0
  %835 = vmatpush1.msra.mxu0 0.0
  %836 = vmatprep.subr.mxu0 0.0
  %837 = vmatpush1.msra.mxu0 0.0
  %838 = vmatprep.subr.mxu0 0.0
  %839 = vmatpush1.msra.mxu0 0.0
  %840 = vmatprep.subr.mxu0 0.0
  %841 = vmatpush1.msra.mxu0 0.0
  %842 = vmatprep.subr.mxu0 0.0
  %843 = vmatpush1.msra.mxu0 0.0
  %844 = vmatprep.subr.mxu0 0.0
  %845 = vmatpush1.msra.mxu0 0.0
  %846 = vmatprep.subr.mxu0 0.0
  %847 = vmatpush1.msra.mxu0 0.0
  %848 = vmatprep.subr.mxu0 0.0
  %849 = vmatpush1.msra.mxu0 0.0
  %850 = vmatprep.subr.mxu0 0.0
  %851 = vmatpush1.msra.mxu0 0.0
  %852 = vmatprep.mubr.f32.mxu0 0.0
  %853 = vmatmul.mubr.f32.gmra.mrb[0].mxu0 %v779
  %v854 = vpop.f32.mrb[0].mxu0
  %v855 = vadd.f32 %v775, %v854
  %v856 = vpop.f32.mrb[0].mxu0
  %857 = vmatprep.mubr.f32.mxu0 0.0
  %858 = vmatmul.mubr.f32.gmra.mrb[0].mxu0 %v782
  %v859 = vpop.f32.mrb[0].mxu0
  %v860 = vadd.f32 %v775, %v859
  %v861 = vpop.f32.mrb[0].mxu0
  %862 = vdwg.mxu0
  %865 = vrot.lane.b32.xlu0 %v855, 126
  %v866 = vpop.permute.xlu0 %865
  %867 = vrot.lane.b32.xlu0 %v860, 126
  %v868 = vpop.permute.xlu0 %867
  %871 = vxpose.xlu0.b32.start [1/16] %v866, 128
  %872 = vxpose.xlu0.b32.cont [2/16] %v868, 128
  %873 = vxpose.xlu0.b32.cont [3/16] 0.0, 128
  %874 = vxpose.xlu0.b32.cont [4/16] 0.0, 128
  %875 = vxpose.xlu0.b32.cont [5/16] 0.0, 128
  %876 = vxpose.xlu0.b32.cont [6/16] 0.0, 128
  %877 = vxpose.xlu0.b32.cont [7/16] 0.0, 128
  %878 = vxpose.xlu0.b32.cont [8/16] 0.0, 128
  %879 = vxpose.xlu0.b32.cont [9/16] 0.0, 128
  %880 = vxpose.xlu0.b32.cont [10/16] 0.0, 128
  %881 = vxpose.xlu0.b32.cont [11/16] 0.0, 128
  %882 = vxpose.xlu0.b32.cont [12/16] 0.0, 128
  %883 = vxpose.xlu0.b32.cont [13/16] 0.0, 128
  %884 = vxpose.xlu0.b32.cont [14/16] 0.0, 128
  %885 = vxpose.xlu0.b32.cont [15/16] 0.0, 128
  %886 = vxpose.xlu0.b32.end [16/16] 0.0, 128
  %v887 = vpop.trf.xlu0
  %v888 = vpop.trf.xlu0
  %v889 = vpop.trf.xlu0
  %v890 = vpop.trf.xlu0
  %v891 = vpop.trf.xlu0
  %v892 = vpop.trf.xlu0
  %v893 = vpop.trf.xlu0
  %v894 = vpop.trf.xlu0
  %v895 = vpop.trf.xlu0
  %v896 = vpop.trf.xlu0
  %v897 = vpop.trf.xlu0
  %v898 = vpop.trf.xlu0
  %v899 = vpop.trf.xlu0
  %v900 = vpop.trf.xlu0
  %v901 = vpop.trf.xlu0
  %v902 = vpop.trf.xlu0
  %903 = vset.pattern.permute.xlu0 0
  %904 = vperm.xlu0 %903, %v855
  %v905 = vpop.permute.xlu0 %904
  %v907 = vlaneseq
  %v908 = vshrl.u32 %v907, 7
  %v909 = vsub.s32 0, %v908
  %v910 = vrot.slane %v887, %v909
  %v911 = vadd.f32 %v905, %v910
  %vm912 = vcmp.ge.f32.partialorder %v911, 0.0
  %v913 = vmul.f32 %v911, 0.2
  %v914 = vsel %vm912, %v911, %v913
  %v915 = vsel %vm36, %v914, -1e+30
  %v916 = vsel %vm279, %v915, -inf
  %917 = vmax.xlane.f32.xlu0 %v916
  %v918 = vpop.xlane.xlu0 %917
  %v919 = vsub.f32 %v915, %v918
  %v920 = vmul.f32 %v919, 1.442695
  %v921 = vpow.pop %v920
  %v922 = vmul.f32 %v921, %v38
  %v923 = vsel %vm279, %v922, 0.0
  %924 = vadd.xlane.f32.xlu0 %v923
  %v925 = vpop.xlane.xlu0 %924
  %v926 = vmax.f32 %v925, 1e-30
  %v927 = vrcp.pop %v926
  %v928 = vmul.f32 %v922, %v927
  %929 = vset.pattern.permute.xlu0 1
  %930 = vperm.xlu0 %929, %v855
  %v931 = vpop.permute.xlu0 %930
  %v933 = vlaneseq
  %v934 = vshrl.u32 %v933, 7
  %v935 = vsub.s32 1, %v934
  %v936 = vrot.slane %v887, %v935
  %v937 = vadd.f32 %v931, %v936
  %vm938 = vcmp.ge.f32.partialorder %v937, 0.0
  %v939 = vmul.f32 %v937, 0.2
  %v940 = vsel %vm938, %v937, %v939
  %v941 = vsel %vm36, %v940, -1e+30
  %v942 = vsel %vm279, %v941, -inf
  %943 = vmax.xlane.f32.xlu0 %v942
  %v944 = vpop.xlane.xlu0 %943
  %v945 = vsub.f32 %v941, %v944
  %v946 = vmul.f32 %v945, 1.442695
  %v947 = vpow.pop %v946
  %v948 = vmul.f32 %v947, %v38
  %v949 = vsel %vm279, %v948, 0.0
  %950 = vadd.xlane.f32.xlu0 %v949
  %v951 = vpop.xlane.xlu0 %950
  %v952 = vmax.f32 %v951, 1e-30
  %v953 = vrcp.pop %v952
  %v954 = vmul.f32 %v948, %v953
  %955 = vrot.lane.b32.xlu0 %v763, 125
  %v956 = vpop.permute.xlu0 %955
  %v959 = vsel %vm279, %v954, 0
  %961 = vmatprep.subr.mxu0 0.0
  %962 = vmatpush1.msra.mxu0 %v956
  %963 = vmatprep.subr.mxu0 0.0
  %964 = vmatpush1.msra.mxu0 0.0
  %965 = vmatprep.subr.mxu0 0.0
  %966 = vmatpush1.msra.mxu0 0.0
  %967 = vmatprep.subr.mxu0 0.0
  %968 = vmatpush1.msra.mxu0 0.0
  %969 = vmatprep.subr.mxu0 0.0
  %970 = vmatpush1.msra.mxu0 0.0
  %971 = vmatprep.subr.mxu0 0.0
  %972 = vmatpush1.msra.mxu0 0.0
  %973 = vmatprep.subr.mxu0 0.0
  %974 = vmatpush1.msra.mxu0 0.0
  %975 = vmatprep.subr.mxu0 0.0
  %976 = vmatpush1.msra.mxu0 0.0
  %977 = vmatprep.subr.mxu0 0.0
  %978 = vmatpush1.msra.mxu0 0.0
  %979 = vmatprep.subr.mxu0 0.0
  %980 = vmatpush1.msra.mxu0 0.0
  %981 = vmatprep.subr.mxu0 0.0
  %982 = vmatpush1.msra.mxu0 0.0
  %983 = vmatprep.subr.mxu0 0.0
  %984 = vmatpush1.msra.mxu0 0.0
  %985 = vmatprep.subr.mxu0 0.0
  %986 = vmatpush1.msra.mxu0 0.0
  %987 = vmatprep.subr.mxu0 0.0
  %988 = vmatpush1.msra.mxu0 0.0
  %989 = vmatprep.subr.mxu0 0.0
  %990 = vmatpush1.msra.mxu0 0.0
  %991 = vmatprep.subr.mxu0 0.0
  %992 = vmatpush1.msra.mxu0 0.0
  %993 = vmatprep.subr.mxu0 0.0
  %994 = vmatpush1.msra.mxu0 0.0
  %995 = vmatprep.subr.mxu0 0.0
  %996 = vmatpush1.msra.mxu0 0.0
  %997 = vmatprep.subr.mxu0 0.0
  %998 = vmatpush1.msra.mxu0 0.0
  %999 = vmatprep.subr.mxu0 0.0
  %1000 = vmatpush1.msra.mxu0 0.0
  %1001 = vmatprep.subr.mxu0 0.0
  %1002 = vmatpush1.msra.mxu0 0.0
  %1003 = vmatprep.subr.mxu0 0.0
  %1004 = vmatpush1.msra.mxu0 0.0
  %1005 = vmatprep.subr.mxu0 0.0
  %1006 = vmatpush1.msra.mxu0 0.0
  %1007 = vmatprep.subr.mxu0 0.0
  %1008 = vmatpush1.msra.mxu0 0.0
  %1009 = vmatprep.subr.mxu0 0.0
  %1010 = vmatpush1.msra.mxu0 0.0
  %1011 = vmatprep.subr.mxu0 0.0
  %1012 = vmatpush1.msra.mxu0 0.0
  %1013 = vmatprep.subr.mxu0 0.0
  %1014 = vmatpush1.msra.mxu0 0.0
  %1015 = vmatprep.subr.mxu0 0.0
  %1016 = vmatpush1.msra.mxu0 0.0
  %1017 = vmatprep.subr.mxu0 0.0
  %1018 = vmatpush1.msra.mxu0 0.0
  %1019 = vmatprep.subr.mxu0 0.0
  %1020 = vmatpush1.msra.mxu0 0.0
  %1021 = vmatprep.subr.mxu0 0.0
  %1022 = vmatpush1.msra.mxu0 0.0
  %1023 = vmatprep.subr.mxu0 0.0
  %1024 = vmatpush1.msra.mxu0 0.0
  %1025 = vmatprep.mubr.f32.mxu0 0.0
  %1026 = vmatmul.mubr.f32.gmra.mrb[0].mxu0 %v959
  %v1027 = vpop.f32.mrb[0].mxu0
  %v1028 = vadd.f32 0.0, %v1027
  %v1029 = vpop.f32.mrb[0].mxu0
  %1030 = vdwg.mxu0
  %v1032 = vsel %vm279, %v928, 0
  %1034 = vmatprep.subr.mxu0 0.0
  %1035 = vmatpush1.msra.mxu0 %v763
  %1036 = vmatprep.subr.mxu0 0.0
  %1037 = vmatpush1.msra.mxu0 0.0
  %1038 = vmatprep.subr.mxu0 0.0
  %1039 = vmatpush1.msra.mxu0 0.0
  %1040 = vmatprep.subr.mxu0 0.0
  %1041 = vmatpush1.msra.mxu0 0.0
  %1042 = vmatprep.subr.mxu0 0.0
  %1043 = vmatpush1.msra.mxu0 0.0
  %1044 = vmatprep.subr.mxu0 0.0
  %1045 = vmatpush1.msra.mxu0 0.0
  %1046 = vmatprep.subr.mxu0 0.0
  %1047 = vmatpush1.msra.mxu0 0.0
  %1048 = vmatprep.subr.mxu0 0.0
  %1049 = vmatpush1.msra.mxu0 0.0
  %1050 = vmatprep.subr.mxu0 0.0
  %1051 = vmatpush1.msra.mxu0 0.0
  %1052 = vmatprep.subr.mxu0 0.0
  %1053 = vmatpush1.msra.mxu0 0.0
  %1054 = vmatprep.subr.mxu0 0.0
  %1055 = vmatpush1.msra.mxu0 0.0
  %1056 = vmatprep.subr.mxu0 0.0
  %1057 = vmatpush1.msra.mxu0 0.0
  %1058 = vmatprep.subr.mxu0 0.0
  %1059 = vmatpush1.msra.mxu0 0.0
  %1060 = vmatprep.subr.mxu0 0.0
  %1061 = vmatpush1.msra.mxu0 0.0
  %1062 = vmatprep.subr.mxu0 0.0
  %1063 = vmatpush1.msra.mxu0 0.0
  %1064 = vmatprep.subr.mxu0 0.0
  %1065 = vmatpush1.msra.mxu0 0.0
  %1066 = vmatprep.subr.mxu0 0.0
  %1067 = vmatpush1.msra.mxu0 0.0
  %1068 = vmatprep.subr.mxu0 0.0
  %1069 = vmatpush1.msra.mxu0 0.0
  %1070 = vmatprep.subr.mxu0 0.0
  %1071 = vmatpush1.msra.mxu0 0.0
  %1072 = vmatprep.subr.mxu0 0.0
  %1073 = vmatpush1.msra.mxu0 0.0
  %1074 = vmatprep.subr.mxu0 0.0
  %1075 = vmatpush1.msra.mxu0 0.0
  %1076 = vmatprep.subr.mxu0 0.0
  %1077 = vmatpush1.msra.mxu0 0.0
  %1078 = vmatprep.subr.mxu0 0.0
  %1079 = vmatpush1.msra.mxu0 0.0
  %1080 = vmatprep.subr.mxu0 0.0
  %1081 = vmatpush1.msra.mxu0 0.0
  %1082 = vmatprep.subr.mxu0 0.0
  %1083 = vmatpush1.msra.mxu0 0.0
  %1084 = vmatprep.subr.mxu0 0.0
  %1085 = vmatpush1.msra.mxu0 0.0
  %1086 = vmatprep.subr.mxu0 0.0
  %1087 = vmatpush1.msra.mxu0 0.0
  %1088 = vmatprep.subr.mxu0 0.0
  %1089 = vmatpush1.msra.mxu0 0.0
  %1090 = vmatprep.subr.mxu0 0.0
  %1091 = vmatpush1.msra.mxu0 0.0
  %1092 = vmatprep.subr.mxu0 0.0
  %1093 = vmatpush1.msra.mxu0 0.0
  %1094 = vmatprep.subr.mxu0 0.0
  %1095 = vmatpush1.msra.mxu0 0.0
  %1096 = vmatprep.subr.mxu0 0.0
  %1097 = vmatpush1.msra.mxu0 0.0
  %1098 = vmatprep.mubr.f32.mxu0 0.0
  %1099 = vmatmul.mubr.f32.gmra.mrb[0].mxu0 %v1032
  %v1100 = vpop.f32.mrb[0].mxu0
  %v1101 = vadd.f32 %v1028, %v1100
  %v1102 = vpop.f32.mrb[0].mxu0
  %1103 = vdwg.mxu0
  %1104 = vset.pattern.permute.xlu0 0
  %1105 = vperm.xlu0 %1104, %v860
  %v1106 = vpop.permute.xlu0 %1105
  %v1108 = vadd.f32 %v1106, %v910
  %vm1109 = vcmp.ge.f32.partialorder %v1108, 0.0
  %v1110 = vmul.f32 %v1108, 0.2
  %v1111 = vsel %vm1109, %v1108, %v1110
  %1113 = vrot.lane.b32.xlu0 %v1111, 120
  %v1114 = vpop.permute.xlu0 %1113
  %v1116 = vsel %vm36, %v1114, -1e+30
  %v1117 = vsel %vm279, %v1116, -inf
  %1118 = vmax.xlane.f32.xlu0 %v1117
  %v1119 = vpop.xlane.xlu0 %1118
  %v1120 = vsub.f32 %v1116, %v1119
  %v1121 = vmul.f32 %v1120, 1.442695
  %v1122 = vpow.pop %v1121
  %v1123 = vmul.f32 %v1122, %v38
  %v1124 = vsel %vm279, %v1123, 0.0
  %1125 = vadd.xlane.f32.xlu0 %v1124
  %v1126 = vpop.xlane.xlu0 %1125
  %v1127 = vmax.f32 %v1126, 1e-30
  %v1128 = vrcp.pop %v1127
  %v1129 = vmul.f32 %v1123, %v1128
  %1130 = vset.pattern.permute.xlu0 1
  %1131 = vperm.xlu0 %1130, %v860
  %v1132 = vpop.permute.xlu0 %1131
  %v1134 = vadd.f32 %v1132, %v936
  %vm1135 = vcmp.ge.f32.partialorder %v1134, 0.0
  %v1136 = vmul.f32 %v1134, 0.2
  %v1137 = vsel %vm1135, %v1134, %v1136
  %1139 = vrot.lane.b32.xlu0 %v1137, 120
  %v1140 = vpop.permute.xlu0 %1139
  %v1142 = vsel %vm36, %v1140, -1e+30
  %v1143 = vsel %vm279, %v1142, -inf
  %1144 = vmax.xlane.f32.xlu0 %v1143
  %v1145 = vpop.xlane.xlu0 %1144
  %v1146 = vsub.f32 %v1142, %v1145
  %v1147 = vmul.f32 %v1146, 1.442695
  %v1148 = vpow.pop %v1147
  %v1149 = vmul.f32 %v1148, %v38
  %v1150 = vsel %vm279, %v1149, 0.0
  %1151 = vadd.xlane.f32.xlu0 %v1150
  %v1152 = vpop.xlane.xlu0 %1151
  %v1153 = vmax.f32 %v1152, 1e-30
  %v1154 = vrcp.pop %v1153
  %v1155 = vmul.f32 %v1149, %v1154
  %1156 = vrot.lane.b32.xlu0 %v768, 125
  %v1157 = vpop.permute.xlu0 %1156
  %v1160 = vsel %vm279, %v1155, 0
  %1162 = vmatprep.subr.mxu0 0.0
  %1163 = vmatpush1.msra.mxu0 %v1157
  %1164 = vmatprep.subr.mxu0 0.0
  %1165 = vmatpush1.msra.mxu0 0.0
  %1166 = vmatprep.subr.mxu0 0.0
  %1167 = vmatpush1.msra.mxu0 0.0
  %1168 = vmatprep.subr.mxu0 0.0
  %1169 = vmatpush1.msra.mxu0 0.0
  %1170 = vmatprep.subr.mxu0 0.0
  %1171 = vmatpush1.msra.mxu0 0.0
  %1172 = vmatprep.subr.mxu0 0.0
  %1173 = vmatpush1.msra.mxu0 0.0
  %1174 = vmatprep.subr.mxu0 0.0
  %1175 = vmatpush1.msra.mxu0 0.0
  %1176 = vmatprep.subr.mxu0 0.0
  %1177 = vmatpush1.msra.mxu0 0.0
  %1178 = vmatprep.subr.mxu0 0.0
  %1179 = vmatpush1.msra.mxu0 0.0
  %1180 = vmatprep.subr.mxu0 0.0
  %1181 = vmatpush1.msra.mxu0 0.0
  %1182 = vmatprep.subr.mxu0 0.0
  %1183 = vmatpush1.msra.mxu0 0.0
  %1184 = vmatprep.subr.mxu0 0.0
  %1185 = vmatpush1.msra.mxu0 0.0
  %1186 = vmatprep.subr.mxu0 0.0
  %1187 = vmatpush1.msra.mxu0 0.0
  %1188 = vmatprep.subr.mxu0 0.0
  %1189 = vmatpush1.msra.mxu0 0.0
  %1190 = vmatprep.subr.mxu0 0.0
  %1191 = vmatpush1.msra.mxu0 0.0
  %1192 = vmatprep.subr.mxu0 0.0
  %1193 = vmatpush1.msra.mxu0 0.0
  %1194 = vmatprep.subr.mxu0 0.0
  %1195 = vmatpush1.msra.mxu0 0.0
  %1196 = vmatprep.subr.mxu0 0.0
  %1197 = vmatpush1.msra.mxu0 0.0
  %1198 = vmatprep.subr.mxu0 0.0
  %1199 = vmatpush1.msra.mxu0 0.0
  %1200 = vmatprep.subr.mxu0 0.0
  %1201 = vmatpush1.msra.mxu0 0.0
  %1202 = vmatprep.subr.mxu0 0.0
  %1203 = vmatpush1.msra.mxu0 0.0
  %1204 = vmatprep.subr.mxu0 0.0
  %1205 = vmatpush1.msra.mxu0 0.0
  %1206 = vmatprep.subr.mxu0 0.0
  %1207 = vmatpush1.msra.mxu0 0.0
  %1208 = vmatprep.subr.mxu0 0.0
  %1209 = vmatpush1.msra.mxu0 0.0
  %1210 = vmatprep.subr.mxu0 0.0
  %1211 = vmatpush1.msra.mxu0 0.0
  %1212 = vmatprep.subr.mxu0 0.0
  %1213 = vmatpush1.msra.mxu0 0.0
  %1214 = vmatprep.subr.mxu0 0.0
  %1215 = vmatpush1.msra.mxu0 0.0
  %1216 = vmatprep.subr.mxu0 0.0
  %1217 = vmatpush1.msra.mxu0 0.0
  %1218 = vmatprep.subr.mxu0 0.0
  %1219 = vmatpush1.msra.mxu0 0.0
  %1220 = vmatprep.subr.mxu0 0.0
  %1221 = vmatpush1.msra.mxu0 0.0
  %1222 = vmatprep.subr.mxu0 0.0
  %1223 = vmatpush1.msra.mxu0 0.0
  %1224 = vmatprep.subr.mxu0 0.0
  %1225 = vmatpush1.msra.mxu0 0.0
  %1226 = vmatprep.mubr.f32.mxu0 0.0
  %1227 = vmatmul.mubr.f32.gmra.mrb[0].mxu0 %v1160
  %v1228 = vpop.f32.mrb[0].mxu0
  %v1229 = vadd.f32 0.0, %v1228
  %v1230 = vpop.f32.mrb[0].mxu0
  %1231 = vdwg.mxu0
  %v1233 = vsel %vm279, %v1129, 0
  %1235 = vmatprep.subr.mxu0 0.0
  %1236 = vmatpush1.msra.mxu0 %v768
  %1237 = vmatprep.subr.mxu0 0.0
  %1238 = vmatpush1.msra.mxu0 0.0
  %1239 = vmatprep.subr.mxu0 0.0
  %1240 = vmatpush1.msra.mxu0 0.0
  %1241 = vmatprep.subr.mxu0 0.0
  %1242 = vmatpush1.msra.mxu0 0.0
  %1243 = vmatprep.subr.mxu0 0.0
  %1244 = vmatpush1.msra.mxu0 0.0
  %1245 = vmatprep.subr.mxu0 0.0
  %1246 = vmatpush1.msra.mxu0 0.0
  %1247 = vmatprep.subr.mxu0 0.0
  %1248 = vmatpush1.msra.mxu0 0.0
  %1249 = vmatprep.subr.mxu0 0.0
  %1250 = vmatpush1.msra.mxu0 0.0
  %1251 = vmatprep.subr.mxu0 0.0
  %1252 = vmatpush1.msra.mxu0 0.0
  %1253 = vmatprep.subr.mxu0 0.0
  %1254 = vmatpush1.msra.mxu0 0.0
  %1255 = vmatprep.subr.mxu0 0.0
  %1256 = vmatpush1.msra.mxu0 0.0
  %1257 = vmatprep.subr.mxu0 0.0
  %1258 = vmatpush1.msra.mxu0 0.0
  %1259 = vmatprep.subr.mxu0 0.0
  %1260 = vmatpush1.msra.mxu0 0.0
  %1261 = vmatprep.subr.mxu0 0.0
  %1262 = vmatpush1.msra.mxu0 0.0
  %1263 = vmatprep.subr.mxu0 0.0
  %1264 = vmatpush1.msra.mxu0 0.0
  %1265 = vmatprep.subr.mxu0 0.0
  %1266 = vmatpush1.msra.mxu0 0.0
  %1267 = vmatprep.subr.mxu0 0.0
  %1268 = vmatpush1.msra.mxu0 0.0
  %1269 = vmatprep.subr.mxu0 0.0
  %1270 = vmatpush1.msra.mxu0 0.0
  %1271 = vmatprep.subr.mxu0 0.0
  %1272 = vmatpush1.msra.mxu0 0.0
  %1273 = vmatprep.subr.mxu0 0.0
  %1274 = vmatpush1.msra.mxu0 0.0
  %1275 = vmatprep.subr.mxu0 0.0
  %1276 = vmatpush1.msra.mxu0 0.0
  %1277 = vmatprep.subr.mxu0 0.0
  %1278 = vmatpush1.msra.mxu0 0.0
  %1279 = vmatprep.subr.mxu0 0.0
  %1280 = vmatpush1.msra.mxu0 0.0
  %1281 = vmatprep.subr.mxu0 0.0
  %1282 = vmatpush1.msra.mxu0 0.0
  %1283 = vmatprep.subr.mxu0 0.0
  %1284 = vmatpush1.msra.mxu0 0.0
  %1285 = vmatprep.subr.mxu0 0.0
  %1286 = vmatpush1.msra.mxu0 0.0
  %1287 = vmatprep.subr.mxu0 0.0
  %1288 = vmatpush1.msra.mxu0 0.0
  %1289 = vmatprep.subr.mxu0 0.0
  %1290 = vmatpush1.msra.mxu0 0.0
  %1291 = vmatprep.subr.mxu0 0.0
  %1292 = vmatpush1.msra.mxu0 0.0
  %1293 = vmatprep.subr.mxu0 0.0
  %1294 = vmatpush1.msra.mxu0 0.0
  %1295 = vmatprep.subr.mxu0 0.0
  %1296 = vmatpush1.msra.mxu0 0.0
  %1297 = vmatprep.subr.mxu0 0.0
  %1298 = vmatpush1.msra.mxu0 0.0
  %1299 = vmatprep.mubr.f32.mxu0 0.0
  %1300 = vmatmul.mubr.f32.gmra.mrb[0].mxu0 %v1233
  %v1301 = vpop.f32.mrb[0].mxu0
  %v1302 = vadd.f32 %v1229, %v1301
  %v1303 = vpop.f32.mrb[0].mxu0
  %1304 = vdwg.mxu0
  %vm1305 = vcmask 23552
  %1306 = vst.msk [vmem:[%s10] sm:$0xff] %vm1305, %v1101
  %1307 = vst.msk [vmem:[%s10 + $0x8] sm:$0xff] %vm1305, %v1302
  // Predicated region
  $region42: #{gat_model_forward.1} parent=0 // pred_check
    _
  $region43: #{gat_model_forward.1} parent=0 // pred_check_branch
    %1309 = sbr.rel (0) target = $region45
  $region44: #{gat_model_forward.1} parent=0 // pred_region
    _
  $region45: #{gat_model_forward.1} parent=0 // pred_fallthru
    _
  // Predicated region
  $region46: #{gat_model_forward.1} parent=0 // pred_check
    _
  $region47: #{gat_model_forward.1} parent=0 // pred_check_branch
    %1311 = sbr.rel (0) target = $region49
  $region48: #{gat_model_forward.1} parent=0 // pred_region
    _
  $region49: #{gat_model_forward.1} parent=0 // pred_fallthru
    _

</llo_original>
